<compile_context>
chip_gen: v7x
topology: tpu7x:2x2x1
jax: 0.10.0
libtpu: 0.0.40
codegen_flags: <defaults>
</compile_context>

<pallas_src>
import functools

import jax
import jax.numpy as jnp
from jax.experimental import pallas as pl
from jax.experimental.pallas import tpu as pltpu


# ===================================== Pallas kernel ===============================
def _shift_time(v, s):
    """v: (Bh, T, C) f32.  Returns w with w[:, t] = v[:, t-s] and zeros for t < s."""
    if s <= 0:
        return v
    T = v.shape[1]
    if s >= T:
        return jnp.zeros_like(v)
    pad = jnp.zeros((v.shape[0], s, v.shape[2]), v.dtype)
    return jnp.concatenate([pad, v[:, : T - s, :]], axis=1)


def _fused_tcn_kernel(x_ref, *rest, kernel_size, dilations, has_ds):
    """Fused TCN (all TemporalBlocks) + decoder Linear for one batch chunk.

    x_ref  : (Bh, T, E) f32
    rest   : per block i (in order):
               w1_ref (Cin, K*Cout [+ Cout if downsample])  bf16
               b1_ref (1, Cout) f32
               bd_ref (1, Cout) f32                          [only if downsample]
               w2_ref (Cout, K*Cout) bf16
               b2_ref (1, Cout) f32
             then: wdec_ref (Cout, F) bf16, bdec_ref (1, F) f32, o_ref (Bh, T, F) f32
    """
    refs = list(rest)
    o_ref = refs.pop(-1)
    it = iter(refs)
    K = kernel_size

    h = x_ref[...].astype(jnp.float32)          # (Bh, T, Cin), VMEM resident
    Bh, T, _ = h.shape

    for i, d in enumerate(dilations):
        w1_ref = next(it)
        b1_ref = next(it)
        bd_ref = next(it) if has_ds[i] else None
        w2_ref = next(it)
        b2_ref = next(it)

        Cin = h.shape[-1]
        Cout = b1_ref.shape[-1]

        # ---- conv1 (+ fused 1x1 downsample shortcut) : one wide MXU issue ----
        w1 = w1_ref[...]                                       # (Cin, K*Cout [+Cout])
        hb = h.reshape(Bh * T, Cin).astype(jnp.bfloat16)
        y = jnp.dot(hb, w1, preferred_element_type=jnp.float32)
        y = y.reshape(Bh, T, w1.shape[-1])

        acc = y[:, :, (K - 1) * Cout : K * Cout]               # tap K-1: zero shift
        for j in range(K - 1):
            s = (K - 1 - j) * d
            acc = acc + _shift_time(y[:, :, j * Cout : (j + 1) * Cout], s)
        h1 = jnp.maximum(acc + b1_ref[...], 0.0)               # chomp+ReLU (dropout=id)

        # shortcut
        if has_ds[i]:
            res = y[:, :, K * Cout :] + bd_ref[...]
        else:
            res = h

        # ---- conv2 ----
        w2 = w2_ref[...]                                       # (Cout, K*Cout)
        y2 = jnp.dot(h1.reshape(Bh * T, Cout).astype(jnp.bfloat16), w2,
                     preferred_element_type=jnp.float32).reshape(Bh, T, K * Cout)
        acc2 = y2[:, :, (K - 1) * Cout : K * Cout]
        for j in range(K - 1):
            s = (K - 1 - j) * d
            acc2 = acc2 + _shift_time(y2[:, :, j * Cout : (j + 1) * Cout], s)
        h2 = jnp.maximum(acc2 + b2_ref[...], 0.0)

        h = jnp.maximum(h2 + res, 0.0)                         # relu(out + res)

    # ---- fused decoder Linear ----
    wdec_ref = next(it)
    bdec_ref = next(it)
    Cout = h.shape[-1]
    out = jnp.dot(h.reshape(Bh * T, Cout).astype(jnp.bfloat16), wdec_ref[...],
                  preferred_element_type=jnp.float32) + bdec_ref[...]
    o_ref[...] = out.reshape(Bh, T, -1).astype(o_ref.dtype)


# ===================================== wrapper ======================================
def _const_spec(arr):
    nd = arr.ndim
    return pl.BlockSpec(arr.shape, lambda b, _nd=nd: (0,) * _nd)


def text_encoder_tcn_forward(params, tokens, *, kernel_size=2, num_splits=None):
    """TextEncoderTCN.forward: returns (y, 0) with y of shape (B, T, word_f)."""
    # TODO(synk): the embedding gather stays in XLA (tiny data-dependent row gather;
    # not worth a Pallas DMA-gather kernel).  emb_dropout is identity at inference.
    h = jnp.take(params['embedding'], tokens, axis=0)          # (B, T, embed_size)
    B, T, E = h.shape
    n_layer = len(params['blocks'])
    dilations = tuple(2 ** i for i in range(n_layer))
    has_ds = tuple('bd' in blk for blk in params['blocks'])
    word_f = params['dec_w'].shape[1]

    # 2-way parallel batch split keeps both TensorCores busy on v7x; on v5e/v6e it is
    # a cheap 2-step serial loop over the (tiny) fully-fused kernel.
    if num_splits is None:
        num_splits = 2 if (B >= 2 and B % 2 == 0) else 1
    Bh = B // num_splits

    args = [h.astype(jnp.float32)]
    in_specs = [pl.BlockSpec((Bh, T, E), lambda b: (b, 0, 0))]
    for blk in params['blocks']:
        names = ('w1', 'b1') + (('bd',) if 'bd' in blk else ()) + ('w2', 'b2')
        for name in names:
            args.append(blk[name])
            in_specs.append(_const_spec(blk[name]))
    for arr in (params['dec_w'], params['dec_b']):
        args.append(arr)
        in_specs.append(_const_spec(arr))

    y = pl.pallas_call(
        functools.partial(_fused_tcn_kernel, kernel_size=kernel_size,
                          dilations=dilations, has_ds=has_ds),
        out_shape=jax.ShapeDtypeStruct((B, T, word_f), jnp.float32),
        grid=(num_splits,),
        in_specs=in_specs,
        out_specs=pl.BlockSpec((Bh, T, word_f), lambda b: (b, 0, 0)),
        compiler_params=pltpu.CompilerParams(dimension_semantics=("parallel",)),
    )(*args)
    return y, 0


# ===================================== parameters ====================================
def _fold_weight_norm(v, g):
    """torch weight_norm (dim=0): w = g * v / ||v|| over (in, kernel) per out channel."""
    norm = jnp.sqrt(jnp.sum(v * v, axis=(1, 2), keepdims=True))
    return v * (g.reshape(-1, 1, 1) / norm)


def init_params(key, *, n_words, embed_size, hidden_size, word_f, n_layer, kernel_size):
    keys = iter(jax.random.split(key, 256))

    def nrm(shape, s):
        return s * jax.random.normal(next(keys), shape, jnp.float32)

    def uni(shape, bound):   # PyTorch Conv1d default bias init U(-1/sqrt(fan_in), ...)
        return jax.random.uniform(next(keys), shape, jnp.float32, -bound, bound)

    p = {'embedding': nrm((n_words, embed_size), 1.0)}         # nn.Embedding ~ N(0,1)

    def mk_conv_wide(cin, cout):
        # TemporalBlock.init_weights: conv weights ~ N(0, 0.01); weight_norm g = ||v||.
        v = nrm((cout, cin, kernel_size), 0.01)
        g = jnp.sqrt(jnp.sum(v * v, axis=(1, 2)))
        w = _fold_weight_norm(v, g)                            # (Cout, Cin, K)
        # wide layout (Cin, K*Cout): columns j*Cout:(j+1)*Cout = tap j
        w_wide = jnp.transpose(w, (1, 2, 0)).reshape(cin, kernel_size * cout)
        b = uni((1, cout), 1.0 / jnp.sqrt(cin * kernel_size))  # PyTorch default bias
        return w_wide, b

    blocks = []
    chans = [embed_size] + [hidden_size] * n_layer
    for i in range(n_layer):
        cin, cout = chans[i], chans[i + 1]
        w1_wide, b1 = mk_conv_wide(cin, cout)
        w2_wide, b2 = mk_conv_wide(cout, cout)
        blk = dict(b1=b1, b2=b2, w2=w2_wide.astype(jnp.bfloat16))
        if cin != cout:                                        # downsample Conv1d(cin,cout,1)
            wd = nrm((cout, cin, 1), 0.01)                     # init_weights: N(0, 0.01)
            w1_wide = jnp.concatenate([w1_wide, jnp.transpose(wd[:, :, 0])], axis=1)
            blk['bd'] = uni((1, cout), 1.0 / jnp.sqrt(cin))    # default bias
        blk['w1'] = w1_wide.astype(jnp.bfloat16)
        blocks.append(blk)
    p['blocks'] = blocks

    # decoder = nn.Linear(hidden, word_f): weight ~ N(0, 0.01), bias = 0
    p['dec_w'] = nrm((hidden_size, word_f), 0.01).astype(jnp.bfloat16)
    p['dec_b'] = jnp.zeros((1, word_f), jnp.float32)
    return p


# ===================================== reference =====================================
def _reference_forward(params, tokens, kernel_size):
    """Pure-JAX (f32) reference of the same forward pass, for a correctness check."""
    h = jnp.take(params['embedding'], tokens, axis=0)
    K = kernel_size
    for i, blk in enumerate(params['blocks']):
        d = 2 ** i
        Cout = blk['b1'].shape[-1]
        T = h.shape[1]
        w1 = blk['w1'].astype(jnp.float32)

        def conv(x, w, b):
            y = jnp.einsum('btc,cn->btn', x, w[:, : K * Cout])
            acc = y[..., (K - 1) * Cout : K * Cout]
            for j in range(K - 1):
                s = (K - 1 - j) * d
                tap = y[..., j * Cout : (j + 1) * Cout]
                acc = acc + jnp.pad(tap, ((0, 0), (s, 0), (0, 0)))[:, :T, :]
            return acc + b

        h1 = jax.nn.relu(conv(h, w1, blk['b1']))
        if 'bd' in blk:
            res = jnp.einsum('btc,cn->btn', h, w1[:, K * Cout :]) + blk['bd']
        else:
            res = h
        h2 = jax.nn.relu(conv(h1, blk['w2'].astype(jnp.float32), blk['b2']))
        h = jax.nn.relu(h2 + res)
    return jnp.einsum('btc,cf->btf', h, params['dec_w'].astype(jnp.float32)) + params['dec_b']


# ===================================== main ==========================================
if __name__ == "__main__":
    key = jax.random.PRNGKey(0)
    kp, kt = jax.random.split(key)

    N_WORDS, EMBED, HIDDEN, WORD_F, N_LAYER, KSIZE = 100, 64, 32, 16, 3, 2
    B, T = 2, 16

    params = init_params(kp, n_words=N_WORDS, embed_size=EMBED, hidden_size=HIDDEN,
                         word_f=WORD_F, n_layer=N_LAYER, kernel_size=KSIZE)
    tokens = jax.random.randint(kt, (B, T), 0, N_WORDS, jnp.int32)

    fwd = jax.jit(functools.partial(text_encoder_tcn_forward, kernel_size=KSIZE))
    y, zero = fwd(params, tokens)
    jax.block_until_ready(y)

    assert y.shape == (B, T, WORD_F)
    assert bool(jnp.all(jnp.isfinite(y)))

    y_ref = _reference_forward(params, tokens, KSIZE)
    assert bool(jnp.allclose(y, y_ref, atol=1e-2, rtol=1e-2))

    print("KERNEL_OK")
</pallas_src>

<mosaic_0001>
module attributes {stable_mosaic.version = 11 : i64} {
  func.func @_fused_tcn_kernel(%arg0: i32, %arg1: memref<1x16x64xf32, #tpu.memory_space<vmem>>, %arg2: memref<64x96xbf16, #tpu.memory_space<vmem>>, %arg3: memref<1x32xf32, #tpu.memory_space<vmem>>, %arg4: memref<1x32xf32, #tpu.memory_space<vmem>>, %arg5: memref<32x64xbf16, #tpu.memory_space<vmem>>, %arg6: memref<1x32xf32, #tpu.memory_space<vmem>>, %arg7: memref<32x64xbf16, #tpu.memory_space<vmem>>, %arg8: memref<1x32xf32, #tpu.memory_space<vmem>>, %arg9: memref<32x64xbf16, #tpu.memory_space<vmem>>, %arg10: memref<1x32xf32, #tpu.memory_space<vmem>>, %arg11: memref<32x64xbf16, #tpu.memory_space<vmem>>, %arg12: memref<1x32xf32, #tpu.memory_space<vmem>>, %arg13: memref<32x64xbf16, #tpu.memory_space<vmem>>, %arg14: memref<1x32xf32, #tpu.memory_space<vmem>>, %arg15: memref<32x16xbf16, #tpu.memory_space<vmem>>, %arg16: memref<1x16xf32, #tpu.memory_space<vmem>>, %arg17: memref<1x16x16xf32, #tpu.memory_space<vmem>>) attributes {dimension_semantics = [#tpu.dimension_semantics<parallel>], iteration_bounds = array<i64: 2>, scalar_prefetch = 0 : i64, scratch_operands = 0 : i64, tpu.core_type = #tpu.core_type<tc>, window_params = [{transform_indices = @transform_0, window_bounds = array<i64: 1, 16, 64>}, {pipeline_mode = #tpu.pipeline_mode<synchronous>, transform_indices = @transform_1, window_bounds = array<i64: 64, 96>}, {pipeline_mode = #tpu.pipeline_mode<synchronous>, transform_indices = @transform_2, window_bounds = array<i64: 1, 32>}, {pipeline_mode = #tpu.pipeline_mode<synchronous>, transform_indices = @transform_3, window_bounds = array<i64: 1, 32>}, {pipeline_mode = #tpu.pipeline_mode<synchronous>, transform_indices = @transform_4, window_bounds = array<i64: 32, 64>}, {pipeline_mode = #tpu.pipeline_mode<synchronous>, transform_indices = @transform_5, window_bounds = array<i64: 1, 32>}, {pipeline_mode = #tpu.pipeline_mode<synchronous>, transform_indices = @transform_6, window_bounds = array<i64: 32, 64>}, {pipeline_mode = #tpu.pipeline_mode<synchronous>, transform_indices = @transform_7, window_bounds = array<i64: 1, 32>}, {pipeline_mode = #tpu.pipeline_mode<synchronous>, transform_indices = @transform_8, window_bounds = array<i64: 32, 64>}, {pipeline_mode = #tpu.pipeline_mode<synchronous>, transform_indices = @transform_9, window_bounds = array<i64: 1, 32>}, {pipeline_mode = #tpu.pipeline_mode<synchronous>, transform_indices = @transform_10, window_bounds = array<i64: 32, 64>}, {pipeline_mode = #tpu.pipeline_mode<synchronous>, transform_indices = @transform_11, window_bounds = array<i64: 1, 32>}, {pipeline_mode = #tpu.pipeline_mode<synchronous>, transform_indices = @transform_12, window_bounds = array<i64: 32, 64>}, {pipeline_mode = #tpu.pipeline_mode<synchronous>, transform_indices = @transform_13, window_bounds = array<i64: 1, 32>}, {pipeline_mode = #tpu.pipeline_mode<synchronous>, transform_indices = @transform_14, window_bounds = array<i64: 32, 16>}, {pipeline_mode = #tpu.pipeline_mode<synchronous>, transform_indices = @transform_15, window_bounds = array<i64: 1, 16>}, {transform_indices = @transform_16, window_bounds = array<i64: 1, 16, 16>}]} {
    %c0 = arith.constant 0 : index
    %c0_0 = arith.constant 0 : index
    %c0_1 = arith.constant 0 : index
    %0 = vector.load %arg1[%c0, %c0_0, %c0_1] : memref<1x16x64xf32, #tpu.memory_space<vmem>>, vector<1x16x64xf32>
    %c0_2 = arith.constant 0 : index
    %c0_3 = arith.constant 0 : index
    %1 = vector.load %arg2[%c0_2, %c0_3] : memref<64x96xbf16, #tpu.memory_space<vmem>>, vector<64x96xbf16>
    %2 = vector.shape_cast %0 : vector<1x16x64xf32> to vector<16x64xf32>
    %3 = arith.truncf %2 : vector<16x64xf32> to vector<16x64xbf16>
    %cst = arith.constant dense<0.000000e+00> : vector<16x96xf32>
    %4 = tpu.matmul %3, %1, %cst {dimension_numbers = #tpu.dot_dimension_numbers<[1], [0], [0], [1], [0, 0, 1, 1], [], []>} : vector<16x64xbf16>, vector<64x96xbf16>, vector<16x96xf32> -> vector<16x96xf32>
    %5 = vector.shape_cast %4 : vector<16x96xf32> to vector<1x16x96xf32>
    %6 = vector.extract_strided_slice %5 {offsets = [0, 0, 32], sizes = [1, 16, 32], strides = [1, 1, 1]} : vector<1x16x96xf32> to vector<1x16x32xf32>
    %7 = vector.extract_strided_slice %5 {offsets = [0, 0, 0], sizes = [1, 16, 32], strides = [1, 1, 1]} : vector<1x16x96xf32> to vector<1x16x32xf32>
    %cst_4 = arith.constant 0.000000e+00 : f32
    %8 = vector.broadcast %cst_4 : f32 to vector<1x1x32xf32>
    %9 = vector.extract_strided_slice %7 {offsets = [0, 0, 0], sizes = [1, 15, 32], strides = [1, 1, 1]} : vector<1x16x32xf32> to vector<1x15x32xf32>
    %10 = tpu.concatenate %8, %9 in 1 : vector<1x1x32xf32>, vector<1x15x32xf32> -> vector<1x16x32xf32>
    %11 = arith.addf %6, %10 : vector<1x16x32xf32>
    %c0_5 = arith.constant 0 : index
    %c0_6 = arith.constant 0 : index
    %12 = vector.load %arg3[%c0_5, %c0_6] : memref<1x32xf32, #tpu.memory_space<vmem>>, vector<1x32xf32>
    %13 = vector.shape_cast %12 : vector<1x32xf32> to vector<1x1x32xf32>
    %14 = vector.broadcast %13 : vector<1x1x32xf32> to vector<1x16x32xf32>
    %15 = arith.addf %11, %14 : vector<1x16x32xf32>
    %cst_7 = arith.constant 0.000000e+00 : f32
    %16 = vector.broadcast %cst_7 : f32 to vector<1x16x32xf32>
    %17 = arith.maximumf %15, %16 : vector<1x16x32xf32>
    %18 = vector.extract_strided_slice %5 {offsets = [0, 0, 64], sizes = [1, 16, 32], strides = [1, 1, 1]} : vector<1x16x96xf32> to vector<1x16x32xf32>
    %c0_8 = arith.constant 0 : index
    %c0_9 = arith.constant 0 : index
    %19 = vector.load %arg4[%c0_8, %c0_9] : memref<1x32xf32, #tpu.memory_space<vmem>>, vector<1x32xf32>
    %20 = vector.shape_cast %19 : vector<1x32xf32> to vector<1x1x32xf32>
    %21 = vector.broadcast %20 : vector<1x1x32xf32> to vector<1x16x32xf32>
    %22 = arith.addf %18, %21 : vector<1x16x32xf32>
    %c0_10 = arith.constant 0 : index
    %c0_11 = arith.constant 0 : index
    %23 = vector.load %arg5[%c0_10, %c0_11] : memref<32x64xbf16, #tpu.memory_space<vmem>>, vector<32x64xbf16>
    %24 = vector.shape_cast %17 : vector<1x16x32xf32> to vector<16x32xf32>
    %25 = arith.truncf %24 : vector<16x32xf32> to vector<16x32xbf16>
    %cst_12 = arith.constant dense<0.000000e+00> : vector<16x64xf32>
    %26 = tpu.matmul %25, %23, %cst_12 {dimension_numbers = #tpu.dot_dimension_numbers<[1], [0], [0], [1], [0, 0, 1, 1], [], []>} : vector<16x32xbf16>, vector<32x64xbf16>, vector<16x64xf32> -> vector<16x64xf32>
    %27 = vector.shape_cast %26 : vector<16x64xf32> to vector<1x16x64xf32>
    %28 = vector.extract_strided_slice %27 {offsets = [0, 0, 32], sizes = [1, 16, 32], strides = [1, 1, 1]} : vector<1x16x64xf32> to vector<1x16x32xf32>
    %29 = vector.extract_strided_slice %27 {offsets = [0, 0, 0], sizes = [1, 16, 32], strides = [1, 1, 1]} : vector<1x16x64xf32> to vector<1x16x32xf32>
    %cst_13 = arith.constant 0.000000e+00 : f32
    %30 = vector.broadcast %cst_13 : f32 to vector<1x1x32xf32>
    %31 = vector.extract_strided_slice %29 {offsets = [0, 0, 0], sizes = [1, 15, 32], strides = [1, 1, 1]} : vector<1x16x32xf32> to vector<1x15x32xf32>
    %32 = tpu.concatenate %30, %31 in 1 : vector<1x1x32xf32>, vector<1x15x32xf32> -> vector<1x16x32xf32>
    %33 = arith.addf %28, %32 : vector<1x16x32xf32>
    %c0_14 = arith.constant 0 : index
    %c0_15 = arith.constant 0 : index
    %34 = vector.load %arg6[%c0_14, %c0_15] : memref<1x32xf32, #tpu.memory_space<vmem>>, vector<1x32xf32>
    %35 = vector.shape_cast %34 : vector<1x32xf32> to vector<1x1x32xf32>
    %36 = vector.broadcast %35 : vector<1x1x32xf32> to vector<1x16x32xf32>
    %37 = arith.addf %33, %36 : vector<1x16x32xf32>
    %cst_16 = arith.constant 0.000000e+00 : f32
    %38 = vector.broadcast %cst_16 : f32 to vector<1x16x32xf32>
    %39 = arith.maximumf %37, %38 : vector<1x16x32xf32>
    %40 = arith.addf %39, %22 : vector<1x16x32xf32>
    %cst_17 = arith.constant 0.000000e+00 : f32
    %41 = vector.broadcast %cst_17 : f32 to vector<1x16x32xf32>
    %42 = arith.maximumf %40, %41 : vector<1x16x32xf32>
    %c0_18 = arith.constant 0 : index
    %c0_19 = arith.constant 0 : index
    %43 = vector.load %arg7[%c0_18, %c0_19] : memref<32x64xbf16, #tpu.memory_space<vmem>>, vector<32x64xbf16>
    %44 = vector.shape_cast %42 : vector<1x16x32xf32> to vector<16x32xf32>
    %45 = arith.truncf %44 : vector<16x32xf32> to vector<16x32xbf16>
    %cst_20 = arith.constant dense<0.000000e+00> : vector<16x64xf32>
    %46 = tpu.matmul %45, %43, %cst_20 {dimension_numbers = #tpu.dot_dimension_numbers<[1], [0], [0], [1], [0, 0, 1, 1], [], []>} : vector<16x32xbf16>, vector<32x64xbf16>, vector<16x64xf32> -> vector<16x64xf32>
    %47 = vector.shape_cast %46 : vector<16x64xf32> to vector<1x16x64xf32>
    %48 = vector.extract_strided_slice %47 {offsets = [0, 0, 32], sizes = [1, 16, 32], strides = [1, 1, 1]} : vector<1x16x64xf32> to vector<1x16x32xf32>
    %49 = vector.extract_strided_slice %47 {offsets = [0, 0, 0], sizes = [1, 16, 32], strides = [1, 1, 1]} : vector<1x16x64xf32> to vector<1x16x32xf32>
    %cst_21 = arith.constant 0.000000e+00 : f32
    %50 = vector.broadcast %cst_21 : f32 to vector<1x2x32xf32>
    %51 = vector.extract_strided_slice %49 {offsets = [0, 0, 0], sizes = [1, 14, 32], strides = [1, 1, 1]} : vector<1x16x32xf32> to vector<1x14x32xf32>
    %52 = tpu.concatenate %50, %51 in 1 : vector<1x2x32xf32>, vector<1x14x32xf32> -> vector<1x16x32xf32>
    %53 = arith.addf %48, %52 : vector<1x16x32xf32>
    %c0_22 = arith.constant 0 : index
    %c0_23 = arith.constant 0 : index
    %54 = vector.load %arg8[%c0_22, %c0_23] : memref<1x32xf32, #tpu.memory_space<vmem>>, vector<1x32xf32>
    %55 = vector.shape_cast %54 : vector<1x32xf32> to vector<1x1x32xf32>
    %56 = vector.broadcast %55 : vector<1x1x32xf32> to vector<1x16x32xf32>
    %57 = arith.addf %53, %56 : vector<1x16x32xf32>
    %cst_24 = arith.constant 0.000000e+00 : f32
    %58 = vector.broadcast %cst_24 : f32 to vector<1x16x32xf32>
    %59 = arith.maximumf %57, %58 : vector<1x16x32xf32>
    %c0_25 = arith.constant 0 : index
    %c0_26 = arith.constant 0 : index
    %60 = vector.load %arg9[%c0_25, %c0_26] : memref<32x64xbf16, #tpu.memory_space<vmem>>, vector<32x64xbf16>
    %61 = vector.shape_cast %59 : vector<1x16x32xf32> to vector<16x32xf32>
    %62 = arith.truncf %61 : vector<16x32xf32> to vector<16x32xbf16>
    %cst_27 = arith.constant dense<0.000000e+00> : vector<16x64xf32>
    %63 = tpu.matmul %62, %60, %cst_27 {dimension_numbers = #tpu.dot_dimension_numbers<[1], [0], [0], [1], [0, 0, 1, 1], [], []>} : vector<16x32xbf16>, vector<32x64xbf16>, vector<16x64xf32> -> vector<16x64xf32>
    %64 = vector.shape_cast %63 : vector<16x64xf32> to vector<1x16x64xf32>
    %65 = vector.extract_strided_slice %64 {offsets = [0, 0, 32], sizes = [1, 16, 32], strides = [1, 1, 1]} : vector<1x16x64xf32> to vector<1x16x32xf32>
    %66 = vector.extract_strided_slice %64 {offsets = [0, 0, 0], sizes = [1, 16, 32], strides = [1, 1, 1]} : vector<1x16x64xf32> to vector<1x16x32xf32>
    %cst_28 = arith.constant 0.000000e+00 : f32
    %67 = vector.broadcast %cst_28 : f32 to vector<1x2x32xf32>
    %68 = vector.extract_strided_slice %66 {offsets = [0, 0, 0], sizes = [1, 14, 32], strides = [1, 1, 1]} : vector<1x16x32xf32> to vector<1x14x32xf32>
    %69 = tpu.concatenate %67, %68 in 1 : vector<1x2x32xf32>, vector<1x14x32xf32> -> vector<1x16x32xf32>
    %70 = arith.addf %65, %69 : vector<1x16x32xf32>
    %c0_29 = arith.constant 0 : index
    %c0_30 = arith.constant 0 : index
    %71 = vector.load %arg10[%c0_29, %c0_30] : memref<1x32xf32, #tpu.memory_space<vmem>>, vector<1x32xf32>
    %72 = vector.shape_cast %71 : vector<1x32xf32> to vector<1x1x32xf32>
    %73 = vector.broadcast %72 : vector<1x1x32xf32> to vector<1x16x32xf32>
    %74 = arith.addf %70, %73 : vector<1x16x32xf32>
    %cst_31 = arith.constant 0.000000e+00 : f32
    %75 = vector.broadcast %cst_31 : f32 to vector<1x16x32xf32>
    %76 = arith.maximumf %74, %75 : vector<1x16x32xf32>
    %77 = arith.addf %76, %42 : vector<1x16x32xf32>
    %cst_32 = arith.constant 0.000000e+00 : f32
    %78 = vector.broadcast %cst_32 : f32 to vector<1x16x32xf32>
    %79 = arith.maximumf %77, %78 : vector<1x16x32xf32>
    %c0_33 = arith.constant 0 : index
    %c0_34 = arith.constant 0 : index
    %80 = vector.load %arg11[%c0_33, %c0_34] : memref<32x64xbf16, #tpu.memory_space<vmem>>, vector<32x64xbf16>
    %81 = vector.shape_cast %79 : vector<1x16x32xf32> to vector<16x32xf32>
    %82 = arith.truncf %81 : vector<16x32xf32> to vector<16x32xbf16>
    %cst_35 = arith.constant dense<0.000000e+00> : vector<16x64xf32>
    %83 = tpu.matmul %82, %80, %cst_35 {dimension_numbers = #tpu.dot_dimension_numbers<[1], [0], [0], [1], [0, 0, 1, 1], [], []>} : vector<16x32xbf16>, vector<32x64xbf16>, vector<16x64xf32> -> vector<16x64xf32>
    %84 = vector.shape_cast %83 : vector<16x64xf32> to vector<1x16x64xf32>
    %85 = vector.extract_strided_slice %84 {offsets = [0, 0, 32], sizes = [1, 16, 32], strides = [1, 1, 1]} : vector<1x16x64xf32> to vector<1x16x32xf32>
    %86 = vector.extract_strided_slice %84 {offsets = [0, 0, 0], sizes = [1, 16, 32], strides = [1, 1, 1]} : vector<1x16x64xf32> to vector<1x16x32xf32>
    %cst_36 = arith.constant 0.000000e+00 : f32
    %87 = vector.broadcast %cst_36 : f32 to vector<1x4x32xf32>
    %88 = vector.extract_strided_slice %86 {offsets = [0, 0, 0], sizes = [1, 12, 32], strides = [1, 1, 1]} : vector<1x16x32xf32> to vector<1x12x32xf32>
    %89 = tpu.concatenate %87, %88 in 1 : vector<1x4x32xf32>, vector<1x12x32xf32> -> vector<1x16x32xf32>
    %90 = arith.addf %85, %89 : vector<1x16x32xf32>
    %c0_37 = arith.constant 0 : index
    %c0_38 = arith.constant 0 : index
    %91 = vector.load %arg12[%c0_37, %c0_38] : memref<1x32xf32, #tpu.memory_space<vmem>>, vector<1x32xf32>
    %92 = vector.shape_cast %91 : vector<1x32xf32> to vector<1x1x32xf32>
    %93 = vector.broadcast %92 : vector<1x1x32xf32> to vector<1x16x32xf32>
    %94 = arith.addf %90, %93 : vector<1x16x32xf32>
    %cst_39 = arith.constant 0.000000e+00 : f32
    %95 = vector.broadcast %cst_39 : f32 to vector<1x16x32xf32>
    %96 = arith.maximumf %94, %95 : vector<1x16x32xf32>
    %c0_40 = arith.constant 0 : index
    %c0_41 = arith.constant 0 : index
    %97 = vector.load %arg13[%c0_40, %c0_41] : memref<32x64xbf16, #tpu.memory_space<vmem>>, vector<32x64xbf16>
    %98 = vector.shape_cast %96 : vector<1x16x32xf32> to vector<16x32xf32>
    %99 = arith.truncf %98 : vector<16x32xf32> to vector<16x32xbf16>
    %cst_42 = arith.constant dense<0.000000e+00> : vector<16x64xf32>
    %100 = tpu.matmul %99, %97, %cst_42 {dimension_numbers = #tpu.dot_dimension_numbers<[1], [0], [0], [1], [0, 0, 1, 1], [], []>} : vector<16x32xbf16>, vector<32x64xbf16>, vector<16x64xf32> -> vector<16x64xf32>
    %101 = vector.shape_cast %100 : vector<16x64xf32> to vector<1x16x64xf32>
    %102 = vector.extract_strided_slice %101 {offsets = [0, 0, 32], sizes = [1, 16, 32], strides = [1, 1, 1]} : vector<1x16x64xf32> to vector<1x16x32xf32>
    %103 = vector.extract_strided_slice %101 {offsets = [0, 0, 0], sizes = [1, 16, 32], strides = [1, 1, 1]} : vector<1x16x64xf32> to vector<1x16x32xf32>
    %cst_43 = arith.constant 0.000000e+00 : f32
    %104 = vector.broadcast %cst_43 : f32 to vector<1x4x32xf32>
    %105 = vector.extract_strided_slice %103 {offsets = [0, 0, 0], sizes = [1, 12, 32], strides = [1, 1, 1]} : vector<1x16x32xf32> to vector<1x12x32xf32>
    %106 = tpu.concatenate %104, %105 in 1 : vector<1x4x32xf32>, vector<1x12x32xf32> -> vector<1x16x32xf32>
    %107 = arith.addf %102, %106 : vector<1x16x32xf32>
    %c0_44 = arith.constant 0 : index
    %c0_45 = arith.constant 0 : index
    %108 = vector.load %arg14[%c0_44, %c0_45] : memref<1x32xf32, #tpu.memory_space<vmem>>, vector<1x32xf32>
    %109 = vector.shape_cast %108 : vector<1x32xf32> to vector<1x1x32xf32>
    %110 = vector.broadcast %109 : vector<1x1x32xf32> to vector<1x16x32xf32>
    %111 = arith.addf %107, %110 : vector<1x16x32xf32>
    %cst_46 = arith.constant 0.000000e+00 : f32
    %112 = vector.broadcast %cst_46 : f32 to vector<1x16x32xf32>
    %113 = arith.maximumf %111, %112 : vector<1x16x32xf32>
    %114 = arith.addf %113, %79 : vector<1x16x32xf32>
    %cst_47 = arith.constant 0.000000e+00 : f32
    %115 = vector.broadcast %cst_47 : f32 to vector<1x16x32xf32>
    %116 = arith.maximumf %114, %115 : vector<1x16x32xf32>
    %117 = vector.shape_cast %116 : vector<1x16x32xf32> to vector<16x32xf32>
    %118 = arith.truncf %117 : vector<16x32xf32> to vector<16x32xbf16>
    %c0_48 = arith.constant 0 : index
    %c0_49 = arith.constant 0 : index
    %119 = vector.load %arg15[%c0_48, %c0_49] : memref<32x16xbf16, #tpu.memory_space<vmem>>, vector<32x16xbf16>
    %cst_50 = arith.constant dense<0.000000e+00> : vector<16x16xf32>
    %120 = tpu.matmul %118, %119, %cst_50 {dimension_numbers = #tpu.dot_dimension_numbers<[1], [0], [0], [1], [0, 0, 1, 1], [], []>} : vector<16x32xbf16>, vector<32x16xbf16>, vector<16x16xf32> -> vector<16x16xf32>
    %c0_51 = arith.constant 0 : index
    %c0_52 = arith.constant 0 : index
    %121 = vector.load %arg16[%c0_51, %c0_52] : memref<1x16xf32, #tpu.memory_space<vmem>>, vector<1x16xf32>
    %122 = vector.broadcast %121 : vector<1x16xf32> to vector<16x16xf32>
    %123 = arith.addf %120, %122 : vector<16x16xf32>
    %124 = vector.shape_cast %123 : vector<16x16xf32> to vector<1x16x16xf32>
    %c0_53 = arith.constant 0 : index
    %c0_54 = arith.constant 0 : index
    %c0_55 = arith.constant 0 : index
    %125 = vector.load %arg17[%c0_53, %c0_54, %c0_55] : memref<1x16x16xf32, #tpu.memory_space<vmem>>, vector<1x16x16xf32>
    tpu.vector_store %arg17[%c0_53, %c0_54, %c0_55], %124 {strides = array<i32>} : memref<1x16x16xf32, #tpu.memory_space<vmem>>, vector<1x16x16xf32>,
    return
  }
  func.func @transform_0(%arg0: i32) -> (i32, i32, i32) {
    %c0_i32 = arith.constant 0 : i32
    %c0_i32_0 = arith.constant 0 : i32
    %c0_i32_1 = arith.constant 0 : i32
    return %arg0, %c0_i32, %c0_i32_0 : i32, i32, i32
  }
  func.func @transform_1(%arg0: i32) -> (i32, i32) {
    %c0_i32 = arith.constant 0 : i32
    %c0_i32_0 = arith.constant 0 : i32
    %c0_i32_1 = arith.constant 0 : i32
    return %c0_i32, %c0_i32_0 : i32, i32
  }
  func.func @transform_2(%arg0: i32) -> (i32, i32) {
    %c0_i32 = arith.constant 0 : i32
    %c0_i32_0 = arith.constant 0 : i32
    %c0_i32_1 = arith.constant 0 : i32
    return %c0_i32, %c0_i32_0 : i32, i32
  }
  func.func @transform_3(%arg0: i32) -> (i32, i32) {
    %c0_i32 = arith.constant 0 : i32
    %c0_i32_0 = arith.constant 0 : i32
    %c0_i32_1 = arith.constant 0 : i32
    return %c0_i32, %c0_i32_0 : i32, i32
  }
  func.func @transform_4(%arg0: i32) -> (i32, i32) {
    %c0_i32 = arith.constant 0 : i32
    %c0_i32_0 = arith.constant 0 : i32
    %c0_i32_1 = arith.constant 0 : i32
    return %c0_i32, %c0_i32_0 : i32, i32
  }
  func.func @transform_5(%arg0: i32) -> (i32, i32) {
    %c0_i32 = arith.constant 0 : i32
    %c0_i32_0 = arith.constant 0 : i32
    %c0_i32_1 = arith.constant 0 : i32
    return %c0_i32, %c0_i32_0 : i32, i32
  }
  func.func @transform_6(%arg0: i32) -> (i32, i32) {
    %c0_i32 = arith.constant 0 : i32
    %c0_i32_0 = arith.constant 0 : i32
    %c0_i32_1 = arith.constant 0 : i32
    return %c0_i32, %c0_i32_0 : i32, i32
  }
  func.func @transform_7(%arg0: i32) -> (i32, i32) {
    %c0_i32 = arith.constant 0 : i32
    %c0_i32_0 = arith.constant 0 : i32
    %c0_i32_1 = arith.constant 0 : i32
    return %c0_i32, %c0_i32_0 : i32, i32
  }
  func.func @transform_8(%arg0: i32) -> (i32, i32) {
    %c0_i32 = arith.constant 0 : i32
    %c0_i32_0 = arith.constant 0 : i32
    %c0_i32_1 = arith.constant 0 : i32
    return %c0_i32, %c0_i32_0 : i32, i32
  }
  func.func @transform_9(%arg0: i32) -> (i32, i32) {
    %c0_i32 = arith.constant 0 : i32
    %c0_i32_0 = arith.constant 0 : i32
    %c0_i32_1 = arith.constant 0 : i32
    return %c0_i32, %c0_i32_0 : i32, i32
  }
  func.func @transform_10(%arg0: i32) -> (i32, i32) {
    %c0_i32 = arith.constant 0 : i32
    %c0_i32_0 = arith.constant 0 : i32
    %c0_i32_1 = arith.constant 0 : i32
    return %c0_i32, %c0_i32_0 : i32, i32
  }
  func.func @transform_11(%arg0: i32) -> (i32, i32) {
    %c0_i32 = arith.constant 0 : i32
    %c0_i32_0 = arith.constant 0 : i32
    %c0_i32_1 = arith.constant 0 : i32
    return %c0_i32, %c0_i32_0 : i32, i32
  }
  func.func @transform_12(%arg0: i32) -> (i32, i32) {
    %c0_i32 = arith.constant 0 : i32
    %c0_i32_0 = arith.constant 0 : i32
    %c0_i32_1 = arith.constant 0 : i32
    return %c0_i32, %c0_i32_0 : i32, i32
  }
  func.func @transform_13(%arg0: i32) -> (i32, i32) {
    %c0_i32 = arith.constant 0 : i32
    %c0_i32_0 = arith.constant 0 : i32
    %c0_i32_1 = arith.constant 0 : i32
    return %c0_i32, %c0_i32_0 : i32, i32
  }
  func.func @transform_14(%arg0: i32) -> (i32, i32) {
    %c0_i32 = arith.constant 0 : i32
    %c0_i32_0 = arith.constant 0 : i32
    %c0_i32_1 = arith.constant 0 : i32
    return %c0_i32, %c0_i32_0 : i32, i32
  }
  func.func @transform_15(%arg0: i32) -> (i32, i32) {
    %c0_i32 = arith.constant 0 : i32
    %c0_i32_0 = arith.constant 0 : i32
    %c0_i32_1 = arith.constant 0 : i32
    return %c0_i32, %c0_i32_0 : i32, i32
  }
  func.func @transform_16(%arg0: i32) -> (i32, i32, i32) {
    %c0_i32 = arith.constant 0 : i32
    %c0_i32_0 = arith.constant 0 : i32
    %c0_i32_1 = arith.constant 0 : i32
    return %arg0, %c0_i32, %c0_i32_0 : i32, i32, i32
  }
}

</mosaic_0001>

<llo_original>
// kernel: text_encoder_tcn_forward.1
$region0: #{text_encoder_tcn_forward.1}
  #allocation0 [shape = 'u32[]', space=smem, size = 0x4, offset = 0x4, fixed_abs, tag = 'smem constant byte address 0x4 - core index']
  #allocation1 [shape = 'u32[144,128]{1,0:T(1,128)}', space=vmem, size = 0x12000, scoped, tag = 'internal scratch']
  %s0 = inlined_call_operand.vmem [shape: f32[2,16,64], index: 0, kind: input, shape index: {}]
  %s1 = inlined_call_operand.vmem [shape: bf16[64,96], index: 1, kind: input, shape index: {}]
  %s2 = inlined_call_operand.vmem [shape: f32[1,32], index: 2, kind: input, shape index: {}]
  %s3 = inlined_call_operand.vmem [shape: f32[1,32], index: 3, kind: input, shape index: {}]
  %s4 = inlined_call_operand.vmem [shape: bf16[32,64], index: 4, kind: input, shape index: {}]
  %s5 = inlined_call_operand.vmem [shape: f32[1,32], index: 5, kind: input, shape index: {}]
  %s6 = inlined_call_operand.vmem [shape: bf16[32,64], index: 6, kind: input, shape index: {}]
  %s7 = inlined_call_operand.vmem [shape: f32[1,32], index: 7, kind: input, shape index: {}]
  %s8 = inlined_call_operand.vmem [shape: bf16[32,64], index: 8, kind: input, shape index: {}]
  %s9 = inlined_call_operand.vmem [shape: f32[1,32], index: 9, kind: input, shape index: {}]
  %s10 = inlined_call_operand.vmem [shape: bf16[32,64], index: 10, kind: input, shape index: {}]
  %s11 = inlined_call_operand.vmem [shape: f32[1,32], index: 11, kind: input, shape index: {}]
  %s12 = inlined_call_operand.vmem [shape: bf16[32,64], index: 12, kind: input, shape index: {}]
  %s13 = inlined_call_operand.vmem [shape: f32[1,32], index: 13, kind: input, shape index: {}]
  %s14 = inlined_call_operand.vmem [shape: bf16[32,16], index: 14, kind: input, shape index: {}]
  %s15 = inlined_call_operand.vmem [shape: f32[1,16], index: 15, kind: input, shape index: {}]
  %s16 = inlined_call_operand.hbm [shape: f32[2,16,16], index: 16, kind: output, shape index: {}]
  %s17 = sld [smem:[#allocation0]]
  $region97: #{text_encoder_tcn_forward.1} parent=0
    _
  %s19 = ssub.s32 1, %s17
  %s20 = scalar_select 0, %s19, %s17
  $region1: #{text_encoder_tcn_forward.1} parent=0
    #allocation2 [shape = 'u8[16384]{0}', space=vmem, size = 0x4000, scoped, tag = 'output window, operand 0']
    #allocation3 [shape = 's32[2]{0}', space=sflag, size = 0x8, scoped, tag = 'scoped memory for text_encoder_tcn_forward.1']
    %21 = vsyncpa [#allocation3], 0
    %s22 = scalar_lea.sflag [#allocation3], 1
    %23 = vsyncpa %s22, 0
    loop: start=0, step=1, limit=4
    $region2: #{text_encoder_tcn_forward.1} parent=1 // loop_pre_header
      _
    $region3: #{text_encoder_tcn_forward.1} parent=1 // loop_header
      %s25 = sphi 0, %s29
      %p26 = scmp.ge.s32.totalorder %s25, 4
      %s35 = sphi 0, %s37
      %s38 = sphi 0, %s35
      %s39 = sphi 0, %s38
      %s55 = sphi 0, %s39
      %s59 = sphi 0, %s59
      %s61 = sphi 0, %s59
      %s62 = sphi 0, %s61
      %s76 = sphi 0, %s62
      %s80 = sphi 0, %s80
      %s82 = sphi 0, %s80
      %s83 = sphi 0, %s82
      %s97 = sphi 0, %s83
      %s101 = sphi 0, %s101
      %s103 = sphi 0, %s101
      %s104 = sphi 0, %s103
      %s118 = sphi 0, %s104
      %s122 = sphi 0, %s122
      %s124 = sphi 0, %s122
      %s125 = sphi 0, %s124
      %s139 = sphi 0, %s125
      %s143 = sphi 0, %s143
      %s145 = sphi 0, %s143
      %s146 = sphi 0, %s145
      %s160 = sphi 0, %s146
      %s164 = sphi 0, %s164
      %s166 = sphi 0, %s164
      %s167 = sphi 0, %s166
      %s181 = sphi 0, %s167
      %s185 = sphi 0, %s185
      %s187 = sphi 0, %s185
      %s188 = sphi 0, %s187
      %s202 = sphi 0, %s188
      %s206 = sphi 0, %s206
      %s208 = sphi 0, %s206
      %s209 = sphi 0, %s208
      %s223 = sphi 0, %s209
      %s227 = sphi 0, %s227
      %s229 = sphi 0, %s227
      %s230 = sphi 0, %s229
      %s244 = sphi 0, %s230
      %s248 = sphi 0, %s248
      %s250 = sphi 0, %s248
      %s251 = sphi 0, %s250
      %s265 = sphi 0, %s251
      %s269 = sphi 0, %s269
      %s271 = sphi 0, %s269
      %s272 = sphi 0, %s271
      %s286 = sphi 0, %s272
      %s290 = sphi 0, %s290
      %s292 = sphi 0, %s290
      %s293 = sphi 0, %s292
      %s307 = sphi 0, %s293
      %s311 = sphi 0, %s311
      %s313 = sphi 0, %s311
      %s314 = sphi 0, %s313
      %s328 = sphi 0, %s314
      %s332 = sphi 0, %s332
      %s334 = sphi 0, %s332
      %s335 = sphi 0, %s334
      %s349 = sphi 0, %s335
      %s353 = sphi 0, %s353
      %s355 = sphi 0, %s353
      %s356 = sphi 0, %s355
      %s370 = sphi 0, %s356
      %s376 = sphi 0, %s378
      %s379 = sphi 0, %s376
      %s380 = sphi 0, %s379
      %s396 = sphi 0, %s380
    $region4: #{text_encoder_tcn_forward.1} parent=1 // loop_header_branch
      %28 = sbr.rel (%p26) target = $region8
    $region5: #{text_encoder_tcn_forward.1} parent=1 // loop_body
      %s30 = ssub.s32 %s25, 1
      %s31 = ssub.s32 %s25, 2
      %s32 = sadd.s32 %s25, 1
      %s33 = ssub.s32 %s25, %s32
      %p34 = scmp.eq.s32.totalorder %s33, 0
      %s36 = sadd.s32 %s35, 1
      %s37 = scalar_select %p34, %s35, %s36
      %p40 = pneg %p34
      %p41 = scmp.eq.s32.totalorder %s25, 1
      %p42 = por %p40, %p41
      %p43 = scmp.ne.s32.totalorder %s35, %s38
      %p44 = scmp.eq.s32.totalorder %s25, 0
      %p45 = por %p43, %p44
      %p46 = scmp.ne.s32.totalorder %s35, %s38
      %p47 = scmp.eq.s32.totalorder %s30, 1
      %p48 = por %p46, %p47
      %p49 = scmp.ne.s32.totalorder %s38, %s39
      %p50 = scmp.eq.s32.totalorder %s30, 0
      %p51 = por %p49, %p50
      %p52 = scmp.ne.s32.totalorder %s38, %s39
      %p53 = scmp.eq.s32.totalorder %s31, 1
      %p54 = por %p52, %p53
      %p56 = scmp.ne.s32.totalorder %s39, %s55
      %p57 = scmp.eq.s32.totalorder %s31, 0
      %p58 = por %p56, %p57
      %s60 = sadd.s32 %s59, 1
      %p63 = scmp.eq.s32.totalorder %s25, 1
      %p64 = scmp.ne.s32.totalorder %s59, %s61
      %p65 = scmp.eq.s32.totalorder %s25, 0
      %p66 = por %p64, %p65
      %p67 = scmp.ne.s32.totalorder %s59, %s61
      %p68 = scmp.eq.s32.totalorder %s30, 1
      %p69 = por %p67, %p68
      %p70 = scmp.ne.s32.totalorder %s61, %s62
      %p71 = scmp.eq.s32.totalorder %s30, 0
      %p72 = por %p70, %p71
      %p73 = scmp.ne.s32.totalorder %s61, %s62
      %p74 = scmp.eq.s32.totalorder %s31, 1
      %p75 = por %p73, %p74
      %p77 = scmp.ne.s32.totalorder %s62, %s76
      %p78 = scmp.eq.s32.totalorder %s31, 0
      %p79 = por %p77, %p78
      %s81 = sadd.s32 %s80, 1
      %p84 = scmp.eq.s32.totalorder %s25, 1
      %p85 = scmp.ne.s32.totalorder %s80, %s82
      %p86 = scmp.eq.s32.totalorder %s25, 0
      %p87 = por %p85, %p86
      %p88 = scmp.ne.s32.totalorder %s80, %s82
      %p89 = scmp.eq.s32.totalorder %s30, 1
      %p90 = por %p88, %p89
      %p91 = scmp.ne.s32.totalorder %s82, %s83
      %p92 = scmp.eq.s32.totalorder %s30, 0
      %p93 = por %p91, %p92
      %p94 = scmp.ne.s32.totalorder %s82, %s83
      %p95 = scmp.eq.s32.totalorder %s31, 1
      %p96 = por %p94, %p95
      %p98 = scmp.ne.s32.totalorder %s83, %s97
      %p99 = scmp.eq.s32.totalorder %s31, 0
      %p100 = por %p98, %p99
      %s102 = sadd.s32 %s101, 1
      %p105 = scmp.eq.s32.totalorder %s25, 1
      %p106 = scmp.ne.s32.totalorder %s101, %s103
      %p107 = scmp.eq.s32.totalorder %s25, 0
      %p108 = por %p106, %p107
      %p109 = scmp.ne.s32.totalorder %s101, %s103
      %p110 = scmp.eq.s32.totalorder %s30, 1
      %p111 = por %p109, %p110
      %p112 = scmp.ne.s32.totalorder %s103, %s104
      %p113 = scmp.eq.s32.totalorder %s30, 0
      %p114 = por %p112, %p113
      %p115 = scmp.ne.s32.totalorder %s103, %s104
      %p116 = scmp.eq.s32.totalorder %s31, 1
      %p117 = por %p115, %p116
      %p119 = scmp.ne.s32.totalorder %s104, %s118
      %p120 = scmp.eq.s32.totalorder %s31, 0
      %p121 = por %p119, %p120
      %s123 = sadd.s32 %s122, 1
      %p126 = scmp.eq.s32.totalorder %s25, 1
      %p127 = scmp.ne.s32.totalorder %s122, %s124
      %p128 = scmp.eq.s32.totalorder %s25, 0
      %p129 = por %p127, %p128
      %p130 = scmp.ne.s32.totalorder %s122, %s124
      %p131 = scmp.eq.s32.totalorder %s30, 1
      %p132 = por %p130, %p131
      %p133 = scmp.ne.s32.totalorder %s124, %s125
      %p134 = scmp.eq.s32.totalorder %s30, 0
      %p135 = por %p133, %p134
      %p136 = scmp.ne.s32.totalorder %s124, %s125
      %p137 = scmp.eq.s32.totalorder %s31, 1
      %p138 = por %p136, %p137
      %p140 = scmp.ne.s32.totalorder %s125, %s139
      %p141 = scmp.eq.s32.totalorder %s31, 0
      %p142 = por %p140, %p141
      %s144 = sadd.s32 %s143, 1
      %p147 = scmp.eq.s32.totalorder %s25, 1
      %p148 = scmp.ne.s32.totalorder %s143, %s145
      %p149 = scmp.eq.s32.totalorder %s25, 0
      %p150 = por %p148, %p149
      %p151 = scmp.ne.s32.totalorder %s143, %s145
      %p152 = scmp.eq.s32.totalorder %s30, 1
      %p153 = por %p151, %p152
      %p154 = scmp.ne.s32.totalorder %s145, %s146
      %p155 = scmp.eq.s32.totalorder %s30, 0
      %p156 = por %p154, %p155
      %p157 = scmp.ne.s32.totalorder %s145, %s146
      %p158 = scmp.eq.s32.totalorder %s31, 1
      %p159 = por %p157, %p158
      %p161 = scmp.ne.s32.totalorder %s146, %s160
      %p162 = scmp.eq.s32.totalorder %s31, 0
      %p163 = por %p161, %p162
      %s165 = sadd.s32 %s164, 1
      %p168 = scmp.eq.s32.totalorder %s25, 1
      %p169 = scmp.ne.s32.totalorder %s164, %s166
      %p170 = scmp.eq.s32.totalorder %s25, 0
      %p171 = por %p169, %p170
      %p172 = scmp.ne.s32.totalorder %s164, %s166
      %p173 = scmp.eq.s32.totalorder %s30, 1
      %p174 = por %p172, %p173
      %p175 = scmp.ne.s32.totalorder %s166, %s167
      %p176 = scmp.eq.s32.totalorder %s30, 0
      %p177 = por %p175, %p176
      %p178 = scmp.ne.s32.totalorder %s166, %s167
      %p179 = scmp.eq.s32.totalorder %s31, 1
      %p180 = por %p178, %p179
      %p182 = scmp.ne.s32.totalorder %s167, %s181
      %p183 = scmp.eq.s32.totalorder %s31, 0
      %p184 = por %p182, %p183
      %s186 = sadd.s32 %s185, 1
      %p189 = scmp.eq.s32.totalorder %s25, 1
      %p190 = scmp.ne.s32.totalorder %s185, %s187
      %p191 = scmp.eq.s32.totalorder %s25, 0
      %p192 = por %p190, %p191
      %p193 = scmp.ne.s32.totalorder %s185, %s187
      %p194 = scmp.eq.s32.totalorder %s30, 1
      %p195 = por %p193, %p194
      %p196 = scmp.ne.s32.totalorder %s187, %s188
      %p197 = scmp.eq.s32.totalorder %s30, 0
      %p198 = por %p196, %p197
      %p199 = scmp.ne.s32.totalorder %s187, %s188
      %p200 = scmp.eq.s32.totalorder %s31, 1
      %p201 = por %p199, %p200
      %p203 = scmp.ne.s32.totalorder %s188, %s202
      %p204 = scmp.eq.s32.totalorder %s31, 0
      %p205 = por %p203, %p204
      %s207 = sadd.s32 %s206, 1
      %p210 = scmp.eq.s32.totalorder %s25, 1
      %p211 = scmp.ne.s32.totalorder %s206, %s208
      %p212 = scmp.eq.s32.totalorder %s25, 0
      %p213 = por %p211, %p212
      %p214 = scmp.ne.s32.totalorder %s206, %s208
      %p215 = scmp.eq.s32.totalorder %s30, 1
      %p216 = por %p214, %p215
      %p217 = scmp.ne.s32.totalorder %s208, %s209
      %p218 = scmp.eq.s32.totalorder %s30, 0
      %p219 = por %p217, %p218
      %p220 = scmp.ne.s32.totalorder %s208, %s209
      %p221 = scmp.eq.s32.totalorder %s31, 1
      %p222 = por %p220, %p221
      %p224 = scmp.ne.s32.totalorder %s209, %s223
      %p225 = scmp.eq.s32.totalorder %s31, 0
      %p226 = por %p224, %p225
      %s228 = sadd.s32 %s227, 1
      %p231 = scmp.eq.s32.totalorder %s25, 1
      %p232 = scmp.ne.s32.totalorder %s227, %s229
      %p233 = scmp.eq.s32.totalorder %s25, 0
      %p234 = por %p232, %p233
      %p235 = scmp.ne.s32.totalorder %s227, %s229
      %p236 = scmp.eq.s32.totalorder %s30, 1
      %p237 = por %p235, %p236
      %p238 = scmp.ne.s32.totalorder %s229, %s230
      %p239 = scmp.eq.s32.totalorder %s30, 0
      %p240 = por %p238, %p239
      %p241 = scmp.ne.s32.totalorder %s229, %s230
      %p242 = scmp.eq.s32.totalorder %s31, 1
      %p243 = por %p241, %p242
      %p245 = scmp.ne.s32.totalorder %s230, %s244
      %p246 = scmp.eq.s32.totalorder %s31, 0
      %p247 = por %p245, %p246
      %s249 = sadd.s32 %s248, 1
      %p252 = scmp.eq.s32.totalorder %s25, 1
      %p253 = scmp.ne.s32.totalorder %s248, %s250
      %p254 = scmp.eq.s32.totalorder %s25, 0
      %p255 = por %p253, %p254
      %p256 = scmp.ne.s32.totalorder %s248, %s250
      %p257 = scmp.eq.s32.totalorder %s30, 1
      %p258 = por %p256, %p257
      %p259 = scmp.ne.s32.totalorder %s250, %s251
      %p260 = scmp.eq.s32.totalorder %s30, 0
      %p261 = por %p259, %p260
      %p262 = scmp.ne.s32.totalorder %s250, %s251
      %p263 = scmp.eq.s32.totalorder %s31, 1
      %p264 = por %p262, %p263
      %p266 = scmp.ne.s32.totalorder %s251, %s265
      %p267 = scmp.eq.s32.totalorder %s31, 0
      %p268 = por %p266, %p267
      %s270 = sadd.s32 %s269, 1
      %p273 = scmp.eq.s32.totalorder %s25, 1
      %p274 = scmp.ne.s32.totalorder %s269, %s271
      %p275 = scmp.eq.s32.totalorder %s25, 0
      %p276 = por %p274, %p275
      %p277 = scmp.ne.s32.totalorder %s269, %s271
      %p278 = scmp.eq.s32.totalorder %s30, 1
      %p279 = por %p277, %p278
      %p280 = scmp.ne.s32.totalorder %s271, %s272
      %p281 = scmp.eq.s32.totalorder %s30, 0
      %p282 = por %p280, %p281
      %p283 = scmp.ne.s32.totalorder %s271, %s272
      %p284 = scmp.eq.s32.totalorder %s31, 1
      %p285 = por %p283, %p284
      %p287 = scmp.ne.s32.totalorder %s272, %s286
      %p288 = scmp.eq.s32.totalorder %s31, 0
      %p289 = por %p287, %p288
      %s291 = sadd.s32 %s290, 1
      %p294 = scmp.eq.s32.totalorder %s25, 1
      %p295 = scmp.ne.s32.totalorder %s290, %s292
      %p296 = scmp.eq.s32.totalorder %s25, 0
      %p297 = por %p295, %p296
      %p298 = scmp.ne.s32.totalorder %s290, %s292
      %p299 = scmp.eq.s32.totalorder %s30, 1
      %p300 = por %p298, %p299
      %p301 = scmp.ne.s32.totalorder %s292, %s293
      %p302 = scmp.eq.s32.totalorder %s30, 0
      %p303 = por %p301, %p302
      %p304 = scmp.ne.s32.totalorder %s292, %s293
      %p305 = scmp.eq.s32.totalorder %s31, 1
      %p306 = por %p304, %p305
      %p308 = scmp.ne.s32.totalorder %s293, %s307
      %p309 = scmp.eq.s32.totalorder %s31, 0
      %p310 = por %p308, %p309
      %s312 = sadd.s32 %s311, 1
      %p315 = scmp.eq.s32.totalorder %s25, 1
      %p316 = scmp.ne.s32.totalorder %s311, %s313
      %p317 = scmp.eq.s32.totalorder %s25, 0
      %p318 = por %p316, %p317
      %p319 = scmp.ne.s32.totalorder %s311, %s313
      %p320 = scmp.eq.s32.totalorder %s30, 1
      %p321 = por %p319, %p320
      %p322 = scmp.ne.s32.totalorder %s313, %s314
      %p323 = scmp.eq.s32.totalorder %s30, 0
      %p324 = por %p322, %p323
      %p325 = scmp.ne.s32.totalorder %s313, %s314
      %p326 = scmp.eq.s32.totalorder %s31, 1
      %p327 = por %p325, %p326
      %p329 = scmp.ne.s32.totalorder %s314, %s328
      %p330 = scmp.eq.s32.totalorder %s31, 0
      %p331 = por %p329, %p330
      %s333 = sadd.s32 %s332, 1
      %p336 = scmp.eq.s32.totalorder %s25, 1
      %p337 = scmp.ne.s32.totalorder %s332, %s334
      %p338 = scmp.eq.s32.totalorder %s25, 0
      %p339 = por %p337, %p338
      %p340 = scmp.ne.s32.totalorder %s332, %s334
      %p341 = scmp.eq.s32.totalorder %s30, 1
      %p342 = por %p340, %p341
      %p343 = scmp.ne.s32.totalorder %s334, %s335
      %p344 = scmp.eq.s32.totalorder %s30, 0
      %p345 = por %p343, %p344
      %p346 = scmp.ne.s32.totalorder %s334, %s335
      %p347 = scmp.eq.s32.totalorder %s31, 1
      %p348 = por %p346, %p347
      %p350 = scmp.ne.s32.totalorder %s335, %s349
      %p351 = scmp.eq.s32.totalorder %s31, 0
      %p352 = por %p350, %p351
      %s354 = sadd.s32 %s353, 1
      %p357 = scmp.eq.s32.totalorder %s25, 1
      %p358 = scmp.ne.s32.totalorder %s353, %s355
      %p359 = scmp.eq.s32.totalorder %s25, 0
      %p360 = por %p358, %p359
      %p361 = scmp.ne.s32.totalorder %s353, %s355
      %p362 = scmp.eq.s32.totalorder %s30, 1
      %p363 = por %p361, %p362
      %p364 = scmp.ne.s32.totalorder %s355, %s356
      %p365 = scmp.eq.s32.totalorder %s30, 0
      %p366 = por %p364, %p365
      %p367 = scmp.ne.s32.totalorder %s355, %s356
      %p368 = scmp.eq.s32.totalorder %s31, 1
      %p369 = por %p367, %p368
      %p371 = scmp.ne.s32.totalorder %s356, %s370
      %p372 = scmp.eq.s32.totalorder %s31, 0
      %p373 = por %p371, %p372
      %s374 = ssub.s32 %s25, %s32
      %p375 = scmp.eq.s32.totalorder %s374, 0
      %s377 = sadd.s32 %s376, 1
      %s378 = scalar_select %p375, %s376, %s377
      %p381 = pneg %p375
      %p382 = scmp.eq.s32.totalorder %s25, 1
      %p383 = por %p381, %p382
      %p384 = scmp.ne.s32.totalorder %s376, %s379
      %p385 = scmp.eq.s32.totalorder %s25, 0
      %p386 = por %p384, %p385
      %p387 = scmp.ne.s32.totalorder %s376, %s379
      %p388 = scmp.eq.s32.totalorder %s30, 1
      %p389 = por %p387, %p388
      %p390 = scmp.ne.s32.totalorder %s379, %s380
      %p391 = scmp.eq.s32.totalorder %s30, 0
      %p392 = por %p390, %p391
      %p393 = scmp.ne.s32.totalorder %s379, %s380
      %p394 = scmp.eq.s32.totalorder %s31, 1
      %p395 = por %p393, %p394
      %p397 = scmp.ne.s32.totalorder %s380, %s396
      %p398 = scmp.eq.s32.totalorder %s31, 0
      %p399 = por %p397, %p398
      %p400 = scmp.le.s32.totalorder 1, %s25
      %p401 = scmp.lt.s32.totalorder %s25, 3
      %p402 = pnand %p400, %p401
      %p403 = pneg %p402
      // Predicated region
      $region9: #{text_encoder_tcn_forward.1} parent=5 // pred_check
        _
      $region10: #{text_encoder_tcn_forward.1} parent=5 // pred_check_branch
        %405 = sbr.rel (%p402) target = $region12
      $region11: #{text_encoder_tcn_forward.1} parent=5 // pred_region
        %s406 = ssub.s32 %s25, 1
        // Predicated region
        $region13: #{text_encoder_tcn_forward.1} parent=11 // pred_check
          %p407 = pneg %p72
        $region14: #{text_encoder_tcn_forward.1} parent=11 // pred_check_branch
          %409 = sbr.rel (%p407) target = $region16
        $region15: #{text_encoder_tcn_forward.1} parent=11 // pred_region
          _
        $region16: #{text_encoder_tcn_forward.1} parent=11 // pred_fallthru
          _
        // Predicated region
        $region17: #{text_encoder_tcn_forward.1} parent=11 // pred_check
          %p410 = pneg %p93
        $region18: #{text_encoder_tcn_forward.1} parent=11 // pred_check_branch
          %412 = sbr.rel (%p410) target = $region20
        $region19: #{text_encoder_tcn_forward.1} parent=11 // pred_region
          _
        $region20: #{text_encoder_tcn_forward.1} parent=11 // pred_fallthru
          _
        // Predicated region
        $region21: #{text_encoder_tcn_forward.1} parent=11 // pred_check
          %p413 = pneg %p114
        $region22: #{text_encoder_tcn_forward.1} parent=11 // pred_check_branch
          %415 = sbr.rel (%p413) target = $region24
        $region23: #{text_encoder_tcn_forward.1} parent=11 // pred_region
          _
        $region24: #{text_encoder_tcn_forward.1} parent=11 // pred_fallthru
          _
        // Predicated region
        $region25: #{text_encoder_tcn_forward.1} parent=11 // pred_check
          %p416 = pneg %p135
        $region26: #{text_encoder_tcn_forward.1} parent=11 // pred_check_branch
          %418 = sbr.rel (%p416) target = $region28
        $region27: #{text_encoder_tcn_forward.1} parent=11 // pred_region
          _
        $region28: #{text_encoder_tcn_forward.1} parent=11 // pred_fallthru
          _
        // Predicated region
        $region29: #{text_encoder_tcn_forward.1} parent=11 // pred_check
          %p419 = pneg %p156
        $region30: #{text_encoder_tcn_forward.1} parent=11 // pred_check_branch
          %421 = sbr.rel (%p419) target = $region32
        $region31: #{text_encoder_tcn_forward.1} parent=11 // pred_region
          _
        $region32: #{text_encoder_tcn_forward.1} parent=11 // pred_fallthru
          _
        // Predicated region
        $region33: #{text_encoder_tcn_forward.1} parent=11 // pred_check
          %p422 = pneg %p177
        $region34: #{text_encoder_tcn_forward.1} parent=11 // pred_check_branch
          %424 = sbr.rel (%p422) target = $region36
        $region35: #{text_encoder_tcn_forward.1} parent=11 // pred_region
          _
        $region36: #{text_encoder_tcn_forward.1} parent=11 // pred_fallthru
          _
        // Predicated region
        $region37: #{text_encoder_tcn_forward.1} parent=11 // pred_check
          %p425 = pneg %p198
        $region38: #{text_encoder_tcn_forward.1} parent=11 // pred_check_branch
          %427 = sbr.rel (%p425) target = $region40
        $region39: #{text_encoder_tcn_forward.1} parent=11 // pred_region
          _
        $region40: #{text_encoder_tcn_forward.1} parent=11 // pred_fallthru
          _
        // Predicated region
        $region41: #{text_encoder_tcn_forward.1} parent=11 // pred_check
          %p428 = pneg %p219
        $region42: #{text_encoder_tcn_forward.1} parent=11 // pred_check_branch
          %430 = sbr.rel (%p428) target = $region44
        $region43: #{text_encoder_tcn_forward.1} parent=11 // pred_region
          _
        $region44: #{text_encoder_tcn_forward.1} parent=11 // pred_fallthru
          _
        // Predicated region
        $region45: #{text_encoder_tcn_forward.1} parent=11 // pred_check
          %p431 = pneg %p240
        $region46: #{text_encoder_tcn_forward.1} parent=11 // pred_check_branch
          %433 = sbr.rel (%p431) target = $region48
        $region47: #{text_encoder_tcn_forward.1} parent=11 // pred_region
          _
        $region48: #{text_encoder_tcn_forward.1} parent=11 // pred_fallthru
          _
        // Predicated region
        $region49: #{text_encoder_tcn_forward.1} parent=11 // pred_check
          %p434 = pneg %p261
        $region50: #{text_encoder_tcn_forward.1} parent=11 // pred_check_branch
          %436 = sbr.rel (%p434) target = $region52
        $region51: #{text_encoder_tcn_forward.1} parent=11 // pred_region
          _
        $region52: #{text_encoder_tcn_forward.1} parent=11 // pred_fallthru
          _
        // Predicated region
        $region53: #{text_encoder_tcn_forward.1} parent=11 // pred_check
          %p437 = pneg %p282
        $region54: #{text_encoder_tcn_forward.1} parent=11 // pred_check_branch
          %439 = sbr.rel (%p437) target = $region56
        $region55: #{text_encoder_tcn_forward.1} parent=11 // pred_region
          _
        $region56: #{text_encoder_tcn_forward.1} parent=11 // pred_fallthru
          _
        // Predicated region
        $region57: #{text_encoder_tcn_forward.1} parent=11 // pred_check
          %p440 = pneg %p303
        $region58: #{text_encoder_tcn_forward.1} parent=11 // pred_check_branch
          %442 = sbr.rel (%p440) target = $region60
        $region59: #{text_encoder_tcn_forward.1} parent=11 // pred_region
          _
        $region60: #{text_encoder_tcn_forward.1} parent=11 // pred_fallthru
          _
        // Predicated region
        $region61: #{text_encoder_tcn_forward.1} parent=11 // pred_check
          %p443 = pneg %p324
        $region62: #{text_encoder_tcn_forward.1} parent=11 // pred_check_branch
          %445 = sbr.rel (%p443) target = $region64
        $region63: #{text_encoder_tcn_forward.1} parent=11 // pred_region
          _
        $region64: #{text_encoder_tcn_forward.1} parent=11 // pred_fallthru
          _
        // Predicated region
        $region65: #{text_encoder_tcn_forward.1} parent=11 // pred_check
          %p446 = pneg %p345
        $region66: #{text_encoder_tcn_forward.1} parent=11 // pred_check_branch
          %448 = sbr.rel (%p446) target = $region68
        $region67: #{text_encoder_tcn_forward.1} parent=11 // pred_region
          _
        $region68: #{text_encoder_tcn_forward.1} parent=11 // pred_fallthru
          _
        // Predicated region
        $region69: #{text_encoder_tcn_forward.1} parent=11 // pred_check
          %p449 = pneg %p366
        $region70: #{text_encoder_tcn_forward.1} parent=11 // pred_check_branch
          %451 = sbr.rel (%p449) target = $region72
        $region71: #{text_encoder_tcn_forward.1} parent=11 // pred_region
          _
        $region72: #{text_encoder_tcn_forward.1} parent=11 // pred_fallthru
          _
      $region12: #{text_encoder_tcn_forward.1} parent=5 // pred_fallthru
        _
      %p452 = scmp.lt.s32.totalorder %s25, 2
      // Predicated region
      $region73: #{text_encoder_tcn_forward.1} parent=5 // pred_check
        %p453 = pneg %p452
      $region74: #{text_encoder_tcn_forward.1} parent=5 // pred_check_branch
        %455 = sbr.rel (%p453) target = $region76
      $region75: #{text_encoder_tcn_forward.1} parent=5 // pred_region
        // Predicated region
        $region77: #{text_encoder_tcn_forward.1} parent=75 // pred_check
          %p456 = pneg %p45
        $region78: #{text_encoder_tcn_forward.1} parent=75 // pred_check_branch
          %458 = sbr.rel (%p456) target = $region80
        $region79: #{text_encoder_tcn_forward.1} parent=75 // pred_region
          %p459 = scmp.lt.s32.totalorder %s25, 1
          %s460 = scalar_select %p459, %s25, 1
          %s461 = smul.addr %s460, 2
          %s462 = smul.addr %s461, 8
          %s463 = scalar_lea.vmem %s0, %s462
        $region80: #{text_encoder_tcn_forward.1} parent=75 // pred_fallthru
          _
      $region76: #{text_encoder_tcn_forward.1} parent=5 // pred_fallthru
        _
      %p464 = scmp.le.s32.totalorder 1, %s25
      %p465 = scmp.lt.s32.totalorder %s25, 3
      %p466 = pnand %p464, %p465
      %p467 = pneg %p466
      // Predicated region
      $region81: #{text_encoder_tcn_forward.1} parent=5 // pred_check
        _
      $region82: #{text_encoder_tcn_forward.1} parent=5 // pred_check_branch
        %469 = sbr.rel (%p466) target = $region84
      $region83: #{text_encoder_tcn_forward.1} parent=5 // pred_region
        %s470 = ssub.s32 %s25, 1
        %p471 = scmp.lt.s32.totalorder %s30, 1
        %s472 = scalar_select %p471, %s30, 1
        %s473 = smul.addr %s472, 2
        %s474 = smul.addr %s473, 8
        %s475 = scalar_lea.vmem %s0, %s474
        %p476 = pneg %p51
        %p477 = pneg %p48
        %p478 = pneg %p72
        %p479 = pneg %p69
        %p480 = pneg %p93
        %p481 = pneg %p90
        %p482 = pneg %p114
        %p483 = pneg %p111
        %p484 = pneg %p135
        %p485 = pneg %p132
        %p486 = pneg %p156
        %p487 = pneg %p153
        %p488 = pneg %p177
        %p489 = pneg %p174
        %p490 = pneg %p198
        %p491 = pneg %p195
        %p492 = pneg %p219
        %p493 = pneg %p216
        %p494 = pneg %p240
        %p495 = pneg %p237
        %p496 = pneg %p261
        %p497 = pneg %p258
        %p498 = pneg %p282
        %p499 = pneg %p279
        %p500 = pneg %p303
        %p501 = pneg %p300
        %p502 = pneg %p324
        %p503 = pneg %p321
        %p504 = pneg %p345
        %p505 = pneg %p342
        %p506 = pneg %p366
        %p507 = pneg %p363
        %p508 = pneg %p392
        %p509 = pneg %p389
        %s510 = sand.u32 %s379, 1
        %s511 = scalar_lea.sflag [#allocation3], %s510
        %s512 = sand.u32 %s379, 1
        %s513 = smul.addr %s512, 16
        %s514 = scalar_lea.vmem [#allocation2], %s513
        %p515 = scmp.lt.s32.totalorder %s30, 1
        %s516 = scalar_select %p515, %s30, 1
        %s517 = smul.addr %s516, 2
        %s518 = smul.addr %s517, 8
        %s519 = scalar_lea.vmem %s0, %s518
        %v521 = vld [vmem:[%s519] sm:$0xff]
        %v522 = vld [vmem:[%s519 + $0x8] sm:$0xff]
        %v523 = vld [vmem:[%s1] sm:$0xf]
        %v524 = vld [vmem:[%s1 + $0x4] sm:$0xf]
        %v525 = vld [vmem:[%s1 + $0x8] sm:$0xf]
        %v526 = vld [vmem:[%s1 + $0xc] sm:$0xf]
        %v527 = vld [vmem:[%s1 + $0x10] sm:$0xf]
        %v528 = vld [vmem:[%s1 + $0x14] sm:$0xf]
        %v529 = vld [vmem:[%s1 + $0x18] sm:$0xf]
        %v530 = vld [vmem:[%s1 + $0x1c] sm:$0xf]
        %v531 = vpack.c.bf16 %v522, %v521
        %v540 = vunpack.c.l.b16 %v523
        %v541 = vunpack.c.l.b16 %v524
        %v542 = vunpack.c.l.b16 %v525
        %v543 = vunpack.c.l.b16 %v526
        %v544 = vunpack.c.l.b16 %v527
        %v545 = vunpack.c.l.b16 %v528
        %v546 = vunpack.c.l.b16 %v529
        %v547 = vunpack.c.l.b16 %v530
        %v548 = vpack.c.b16 %v541, %v540
        %v549 = vpack.c.b16 %v543, %v542
        %v550 = vpack.c.b16 %v545, %v544
        %v551 = vpack.c.b16 %v547, %v546
        %vm556 = vcmask 523264
        %v558 = vsel %vm556, %v531, 0
        %560 = vmatprep.subr.bf16.mxu0 0
        %561 = vmatpush1.bf16.msra.mxu0 %v548
        %562 = vmatprep.subr.bf16.mxu0 0
        %563 = vmatpush1.bf16.msra.mxu0 %v549
        %564 = vmatprep.subr.bf16.mxu0 0
        %565 = vmatpush1.bf16.msra.mxu0 %v550
        %566 = vmatprep.subr.bf16.mxu0 0
        %567 = vmatpush1.bf16.msra.mxu0 %v551
        %568 = vmatprep.subr.bf16.mxu0 0
        %569 = vmatpush1.bf16.msra.mxu0 0
        %570 = vmatprep.subr.bf16.mxu0 0
        %571 = vmatpush1.bf16.msra.mxu0 0
        %572 = vmatprep.subr.bf16.mxu0 0
        %573 = vmatpush1.bf16.msra.mxu0 0
        %574 = vmatprep.subr.bf16.mxu0 0
        %575 = vmatpush1.bf16.msra.mxu0 0
        %576 = vmatprep.subr.bf16.mxu0 0
        %577 = vmatpush1.bf16.msra.mxu0 0
        %578 = vmatprep.subr.bf16.mxu0 0
        %579 = vmatpush1.bf16.msra.mxu0 0
        %580 = vmatprep.subr.bf16.mxu0 0
        %581 = vmatpush1.bf16.msra.mxu0 0
        %582 = vmatprep.subr.bf16.mxu0 0
        %583 = vmatpush1.bf16.msra.mxu0 0
        %584 = vmatprep.subr.bf16.mxu0 0
        %585 = vmatpush1.bf16.msra.mxu0 0
        %586 = vmatprep.subr.bf16.mxu0 0
        %587 = vmatpush1.bf16.msra.mxu0 0
        %588 = vmatprep.subr.bf16.mxu0 0
        %589 = vmatpush1.bf16.msra.mxu0 0
        %590 = vmatprep.subr.bf16.mxu0 0
        %591 = vmatpush1.bf16.msra.mxu0 0
        %592 = vmatprep.mubr.bf16.mxu0 0
        %593 = vmatmul.mubr.bf16.gmra.mrb[0].mxu0 %v558
        %v594 = vpop.f32.mrb[0].mxu0
        %v595 = vadd.f32 0.0, %v594
        %v596 = vpop.f32.mrb[0].mxu0
        %v597 = vpop.f32.mrb[0].mxu0
        %v598 = vadd.f32 0.0, %v597
        %v599 = vpop.f32.mrb[0].mxu0
        %600 = vdwg.mxu0
        %vm603 = vcmask 1040384
        %v604 = vrot.slane %v595, 7
        %v605 = vrot.slane %v598, 7
        %v606 = vsel %vm603, %v604, %v605
        %v608 = vsel %vm603, 0.0, %v604
        %610 = vrot.lane.b32.xlu0 %v608, 32
        %v611 = vpop.permute.xlu0 %610
        %612 = vrot.lane.b32.xlu0 %v606, 32
        %v613 = vpop.permute.xlu0 %612
        %v616 = vadd.f32 %v595, %v611
        %v617 = vadd.f32 %v598, %v613
        %v618 = vld [vmem:[%s2] sm:$0x1]
        %v620 = vlaneseq
        %v621 = vshrl.u32 %v620, 7
        %v622 = vsub.s32 0, %v621
        %v623 = vrot.slane %v618, %v622
        %624 = vrot.lane.b32.xlu0 %v623, 32
        %v625 = vpop.permute.xlu0 %624
        %v627 = vadd.f32 %v616, %v625
        %v628 = vadd.f32 %v617, %v625
        %v629 = vmax.f32 %v627, 0.0
        %v630 = vmax.f32 %v628, 0.0
        %v631 = vld [vmem:[%s3] sm:$0x1]
        %v633 = vlaneseq
        %v634 = vshrl.u32 %v633, 7
        %v635 = vsub.s32 0, %v634
        %v636 = vrot.slane %v631, %v635
        %637 = vrot.lane.b32.xlu0 %v636, 64
        %v638 = vpop.permute.xlu0 %637
        %v640 = vadd.f32 %v595, %v638
        %v641 = vadd.f32 %v598, %v638
        %v642 = vld [vmem:[%s4] sm:$0xf]
        %v643 = vld [vmem:[%s4 + $0x4] sm:$0xf]
        %v644 = vld [vmem:[%s4 + $0x8] sm:$0xf]
        %v645 = vld [vmem:[%s4 + $0xc] sm:$0xf]
        %v646 = vpack.c.bf16 %v630, %v629
        %648 = vrot.lane.b32.xlu0 %v646, 96
        %v649 = vpop.permute.xlu0 %648
        %v654 = vunpack.c.l.b16 %v642
        %v655 = vunpack.c.l.b16 %v643
        %v656 = vunpack.c.l.b16 %v644
        %v657 = vunpack.c.l.b16 %v645
        %v658 = vpack.c.b16 %v655, %v654
        %v659 = vpack.c.b16 %v657, %v656
        %vm662 = vcmask 261120
        %v664 = vsel %vm662, %v649, 0
        %666 = vmatprep.subr.bf16.mxu0 0
        %667 = vmatpush1.bf16.msra.mxu0 %v658
        %668 = vmatprep.subr.bf16.mxu0 0
        %669 = vmatpush1.bf16.msra.mxu0 %v659
        %670 = vmatprep.subr.bf16.mxu0 0
        %671 = vmatpush1.bf16.msra.mxu0 0
        %672 = vmatprep.subr.bf16.mxu0 0
        %673 = vmatpush1.bf16.msra.mxu0 0
        %674 = vmatprep.subr.bf16.mxu0 0
        %675 = vmatpush1.bf16.msra.mxu0 0
        %676 = vmatprep.subr.bf16.mxu0 0
        %677 = vmatpush1.bf16.msra.mxu0 0
        %678 = vmatprep.subr.bf16.mxu0 0
        %679 = vmatpush1.bf16.msra.mxu0 0
        %680 = vmatprep.subr.bf16.mxu0 0
        %681 = vmatpush1.bf16.msra.mxu0 0
        %682 = vmatprep.subr.bf16.mxu0 0
        %683 = vmatpush1.bf16.msra.mxu0 0
        %684 = vmatprep.subr.bf16.mxu0 0
        %685 = vmatpush1.bf16.msra.mxu0 0
        %686 = vmatprep.subr.bf16.mxu0 0
        %687 = vmatpush1.bf16.msra.mxu0 0
        %688 = vmatprep.subr.bf16.mxu0 0
        %689 = vmatpush1.bf16.msra.mxu0 0
        %690 = vmatprep.subr.bf16.mxu0 0
        %691 = vmatpush1.bf16.msra.mxu0 0
        %692 = vmatprep.subr.bf16.mxu0 0
        %693 = vmatpush1.bf16.msra.mxu0 0
        %694 = vmatprep.subr.bf16.mxu0 0
        %695 = vmatpush1.bf16.msra.mxu0 0
        %696 = vmatprep.subr.bf16.mxu0 0
        %697 = vmatpush1.bf16.msra.mxu0 0
        %698 = vmatprep.mubr.bf16.mxu0 0
        %699 = vmatmul.mubr.bf16.gmra.mrb[0].mxu0 %v664
        %v700 = vpop.f32.mrb[0].mxu0
        %v701 = vadd.f32 0.0, %v700
        %v702 = vpop.f32.mrb[0].mxu0
        %v703 = vpop.f32.mrb[0].mxu0
        %v704 = vadd.f32 0.0, %v703
        %v705 = vpop.f32.mrb[0].mxu0
        %706 = vdwg.mxu0
        %v709 = vrot.slane %v701, 7
        %v710 = vrot.slane %v704, 7
        %v711 = vsel %vm603, %v709, %v710
        %v713 = vsel %vm603, 0.0, %v709
        %715 = vrot.lane.b32.xlu0 %v713, 32
        %v716 = vpop.permute.xlu0 %715
        %717 = vrot.lane.b32.xlu0 %v711, 32
        %v718 = vpop.permute.xlu0 %717
        %v721 = vadd.f32 %v701, %v716
        %v722 = vadd.f32 %v704, %v718
        %v723 = vld [vmem:[%s5] sm:$0x1]
        %v725 = vlaneseq
        %v726 = vshrl.u32 %v725, 7
        %v727 = vsub.s32 0, %v726
        %v728 = vrot.slane %v723, %v727
        %729 = vrot.lane.b32.xlu0 %v728, 32
        %v730 = vpop.permute.xlu0 %729
        %v732 = vadd.f32 %v721, %v730
        %v733 = vadd.f32 %v722, %v730
        %v734 = vmax.f32 %v732, 0.0
        %v735 = vmax.f32 %v733, 0.0
        %738 = vrot.lane.b32.xlu0 %v640, 96
        %v739 = vpop.permute.xlu0 %738
        %740 = vrot.lane.b32.xlu0 %v641, 96
        %v741 = vpop.permute.xlu0 %740
        %v744 = vadd.f32 %v734, %v739
        %v745 = vadd.f32 %v735, %v741
        %v746 = vmax.f32 %v744, 0.0
        %v747 = vmax.f32 %v745, 0.0
        %v748 = vld [vmem:[%s6] sm:$0xf]
        %v749 = vld [vmem:[%s6 + $0x4] sm:$0xf]
        %v750 = vld [vmem:[%s6 + $0x8] sm:$0xf]
        %v751 = vld [vmem:[%s6 + $0xc] sm:$0xf]
        %v752 = vpack.c.bf16 %v747, %v746
        %754 = vrot.lane.b32.xlu0 %v752, 96
        %v755 = vpop.permute.xlu0 %754
        %v760 = vunpack.c.l.b16 %v748
        %v761 = vunpack.c.l.b16 %v749
        %v762 = vunpack.c.l.b16 %v750
        %v763 = vunpack.c.l.b16 %v751
        %v764 = vpack.c.b16 %v761, %v760
        %v765 = vpack.c.b16 %v763, %v762
        %v769 = vsel %vm662, %v755, 0
        %771 = vmatprep.subr.bf16.mxu0 0
        %772 = vmatpush1.bf16.msra.mxu0 %v764
        %773 = vmatprep.subr.bf16.mxu0 0
        %774 = vmatpush1.bf16.msra.mxu0 %v765
        %775 = vmatprep.subr.bf16.mxu0 0
        %776 = vmatpush1.bf16.msra.mxu0 0
        %777 = vmatprep.subr.bf16.mxu0 0
        %778 = vmatpush1.bf16.msra.mxu0 0
        %779 = vmatprep.subr.bf16.mxu0 0
        %780 = vmatpush1.bf16.msra.mxu0 0
        %781 = vmatprep.subr.bf16.mxu0 0
        %782 = vmatpush1.bf16.msra.mxu0 0
        %783 = vmatprep.subr.bf16.mxu0 0
        %784 = vmatpush1.bf16.msra.mxu0 0
        %785 = vmatprep.subr.bf16.mxu0 0
        %786 = vmatpush1.bf16.msra.mxu0 0
        %787 = vmatprep.subr.bf16.mxu0 0
        %788 = vmatpush1.bf16.msra.mxu0 0
        %789 = vmatprep.subr.bf16.mxu0 0
        %790 = vmatpush1.bf16.msra.mxu0 0
        %791 = vmatprep.subr.bf16.mxu0 0
        %792 = vmatpush1.bf16.msra.mxu0 0
        %793 = vmatprep.subr.bf16.mxu0 0
        %794 = vmatpush1.bf16.msra.mxu0 0
        %795 = vmatprep.subr.bf16.mxu0 0
        %796 = vmatpush1.bf16.msra.mxu0 0
        %797 = vmatprep.subr.bf16.mxu0 0
        %798 = vmatpush1.bf16.msra.mxu0 0
        %799 = vmatprep.subr.bf16.mxu0 0
        %800 = vmatpush1.bf16.msra.mxu0 0
        %801 = vmatprep.subr.bf16.mxu0 0
        %802 = vmatpush1.bf16.msra.mxu0 0
        %803 = vmatprep.mubr.bf16.mxu0 0
        %804 = vmatmul.mubr.bf16.gmra.mrb[0].mxu0 %v769
        %v805 = vpop.f32.mrb[0].mxu0
        %v806 = vadd.f32 0.0, %v805
        %v807 = vpop.f32.mrb[0].mxu0
        %v808 = vpop.f32.mrb[0].mxu0
        %v809 = vadd.f32 0.0, %v808
        %v810 = vpop.f32.mrb[0].mxu0
        %811 = vdwg.mxu0
        %vm814 = vcmask 1041408
        %v815 = vrot.slane %v806, 6
        %v816 = vrot.slane %v809, 6
        %v817 = vsel %vm814, %v815, %v816
        %v819 = vsel %vm814, 0.0, %v815
        %821 = vrot.lane.b32.xlu0 %v819, 32
        %v822 = vpop.permute.xlu0 %821
        %823 = vrot.lane.b32.xlu0 %v817, 32
        %v824 = vpop.permute.xlu0 %823
        %v827 = vadd.f32 %v806, %v822
        %v828 = vadd.f32 %v809, %v824
        %v829 = vld [vmem:[%s7] sm:$0x1]
        %v831 = vlaneseq
        %v832 = vshrl.u32 %v831, 7
        %v833 = vsub.s32 0, %v832
        %v834 = vrot.slane %v829, %v833
        %835 = vrot.lane.b32.xlu0 %v834, 32
        %v836 = vpop.permute.xlu0 %835
        %v838 = vadd.f32 %v827, %v836
        %v839 = vadd.f32 %v828, %v836
        %v840 = vmax.f32 %v838, 0.0
        %v841 = vmax.f32 %v839, 0.0
        %v842 = vld [vmem:[%s8] sm:$0xf]
        %v843 = vld [vmem:[%s8 + $0x4] sm:$0xf]
        %v844 = vld [vmem:[%s8 + $0x8] sm:$0xf]
        %v845 = vld [vmem:[%s8 + $0xc] sm:$0xf]
        %v846 = vpack.c.bf16 %v841, %v840
        %848 = vrot.lane.b32.xlu0 %v846, 96
        %v849 = vpop.permute.xlu0 %848
        %v854 = vunpack.c.l.b16 %v842
        %v855 = vunpack.c.l.b16 %v843
        %v856 = vunpack.c.l.b16 %v844
        %v857 = vunpack.c.l.b16 %v845
        %v858 = vpack.c.b16 %v855, %v854
        %v859 = vpack.c.b16 %v857, %v856
        %v863 = vsel %vm662, %v849, 0
        %865 = vmatprep.subr.bf16.mxu0 0
        %866 = vmatpush1.bf16.msra.mxu0 %v858
        %867 = vmatprep.subr.bf16.mxu0 0
        %868 = vmatpush1.bf16.msra.mxu0 %v859
        %869 = vmatprep.subr.bf16.mxu0 0
        %870 = vmatpush1.bf16.msra.mxu0 0
        %871 = vmatprep.subr.bf16.mxu0 0
        %872 = vmatpush1.bf16.msra.mxu0 0
        %873 = vmatprep.subr.bf16.mxu0 0
        %874 = vmatpush1.bf16.msra.mxu0 0
        %875 = vmatprep.subr.bf16.mxu0 0
        %876 = vmatpush1.bf16.msra.mxu0 0
        %877 = vmatprep.subr.bf16.mxu0 0
        %878 = vmatpush1.bf16.msra.mxu0 0
        %879 = vmatprep.subr.bf16.mxu0 0
        %880 = vmatpush1.bf16.msra.mxu0 0
        %881 = vmatprep.subr.bf16.mxu0 0
        %882 = vmatpush1.bf16.msra.mxu0 0
        %883 = vmatprep.subr.bf16.mxu0 0
        %884 = vmatpush1.bf16.msra.mxu0 0
        %885 = vmatprep.subr.bf16.mxu0 0
        %886 = vmatpush1.bf16.msra.mxu0 0
        %887 = vmatprep.subr.bf16.mxu0 0
        %888 = vmatpush1.bf16.msra.mxu0 0
        %889 = vmatprep.subr.bf16.mxu0 0
        %890 = vmatpush1.bf16.msra.mxu0 0
        %891 = vmatprep.subr.bf16.mxu0 0
        %892 = vmatpush1.bf16.msra.mxu0 0
        %893 = vmatprep.subr.bf16.mxu0 0
        %894 = vmatpush1.bf16.msra.mxu0 0
        %895 = vmatprep.subr.bf16.mxu0 0
        %896 = vmatpush1.bf16.msra.mxu0 0
        %897 = vmatprep.mubr.bf16.mxu0 0
        %898 = vmatmul.mubr.bf16.gmra.mrb[0].mxu0 %v863
        %v899 = vpop.f32.mrb[0].mxu0
        %v900 = vadd.f32 0.0, %v899
        %v901 = vpop.f32.mrb[0].mxu0
        %v902 = vpop.f32.mrb[0].mxu0
        %v903 = vadd.f32 0.0, %v902
        %v904 = vpop.f32.mrb[0].mxu0
        %905 = vdwg.mxu0
        %v908 = vrot.slane %v900, 6
        %v909 = vrot.slane %v903, 6
        %v910 = vsel %vm814, %v908, %v909
        %v912 = vsel %vm814, 0.0, %v908
        %914 = vrot.lane.b32.xlu0 %v912, 32
        %v915 = vpop.permute.xlu0 %914
        %916 = vrot.lane.b32.xlu0 %v910, 32
        %v917 = vpop.permute.xlu0 %916
        %v920 = vadd.f32 %v900, %v915
        %v921 = vadd.f32 %v903, %v917
        %v922 = vld [vmem:[%s9] sm:$0x1]
        %v924 = vlaneseq
        %v925 = vshrl.u32 %v924, 7
        %v926 = vsub.s32 0, %v925
        %v927 = vrot.slane %v922, %v926
        %928 = vrot.lane.b32.xlu0 %v927, 32
        %v929 = vpop.permute.xlu0 %928
        %v931 = vadd.f32 %v920, %v929
        %v932 = vadd.f32 %v921, %v929
        %v933 = vmax.f32 %v931, 0.0
        %v934 = vmax.f32 %v932, 0.0
        %v935 = vadd.f32 %v933, %v746
        %v936 = vadd.f32 %v934, %v747
        %v937 = vmax.f32 %v935, 0.0
        %v938 = vmax.f32 %v936, 0.0
        %v939 = vld [vmem:[%s10] sm:$0xf]
        %v940 = vld [vmem:[%s10 + $0x4] sm:$0xf]
        %v941 = vld [vmem:[%s10 + $0x8] sm:$0xf]
        %v942 = vld [vmem:[%s10 + $0xc] sm:$0xf]
        %v943 = vpack.c.bf16 %v938, %v937
        %945 = vrot.lane.b32.xlu0 %v943, 96
        %v946 = vpop.permute.xlu0 %945
        %v951 = vunpack.c.l.b16 %v939
        %v952 = vunpack.c.l.b16 %v940
        %v953 = vunpack.c.l.b16 %v941
        %v954 = vunpack.c.l.b16 %v942
        %v955 = vpack.c.b16 %v952, %v951
        %v956 = vpack.c.b16 %v954, %v953
        %v960 = vsel %vm662, %v946, 0
        %962 = vmatprep.subr.bf16.mxu0 0
        %963 = vmatpush1.bf16.msra.mxu0 %v955
        %964 = vmatprep.subr.bf16.mxu0 0
        %965 = vmatpush1.bf16.msra.mxu0 %v956
        %966 = vmatprep.subr.bf16.mxu0 0
        %967 = vmatpush1.bf16.msra.mxu0 0
        %968 = vmatprep.subr.bf16.mxu0 0
        %969 = vmatpush1.bf16.msra.mxu0 0
        %970 = vmatprep.subr.bf16.mxu0 0
        %971 = vmatpush1.bf16.msra.mxu0 0
        %972 = vmatprep.subr.bf16.mxu0 0
        %973 = vmatpush1.bf16.msra.mxu0 0
        %974 = vmatprep.subr.bf16.mxu0 0
        %975 = vmatpush1.bf16.msra.mxu0 0
        %976 = vmatprep.subr.bf16.mxu0 0
        %977 = vmatpush1.bf16.msra.mxu0 0
        %978 = vmatprep.subr.bf16.mxu0 0
        %979 = vmatpush1.bf16.msra.mxu0 0
        %980 = vmatprep.subr.bf16.mxu0 0
        %981 = vmatpush1.bf16.msra.mxu0 0
        %982 = vmatprep.subr.bf16.mxu0 0
        %983 = vmatpush1.bf16.msra.mxu0 0
        %984 = vmatprep.subr.bf16.mxu0 0
        %985 = vmatpush1.bf16.msra.mxu0 0
        %986 = vmatprep.subr.bf16.mxu0 0
        %987 = vmatpush1.bf16.msra.mxu0 0
        %988 = vmatprep.subr.bf16.mxu0 0
        %989 = vmatpush1.bf16.msra.mxu0 0
        %990 = vmatprep.subr.bf16.mxu0 0
        %991 = vmatpush1.bf16.msra.mxu0 0
        %992 = vmatprep.subr.bf16.mxu0 0
        %993 = vmatpush1.bf16.msra.mxu0 0
        %994 = vmatprep.mubr.bf16.mxu0 0
        %995 = vmatmul.mubr.bf16.gmra.mrb[0].mxu0 %v960
        %v996 = vpop.f32.mrb[0].mxu0
        %v997 = vadd.f32 0.0, %v996
        %v998 = vpop.f32.mrb[0].mxu0
        %v999 = vpop.f32.mrb[0].mxu0
        %v1000 = vadd.f32 0.0, %v999
        %v1001 = vpop.f32.mrb[0].mxu0
        %1002 = vdwg.mxu0
        %vm1005 = vcmask 1043456
        %v1006 = vrot.slane %v997, 4
        %v1007 = vrot.slane %v1000, 4
        %v1008 = vsel %vm1005, %v1006, %v1007
        %v1010 = vsel %vm1005, 0.0, %v1006
        %1012 = vrot.lane.b32.xlu0 %v1010, 32
        %v1013 = vpop.permute.xlu0 %1012
        %1014 = vrot.lane.b32.xlu0 %v1008, 32
        %v1015 = vpop.permute.xlu0 %1014
        %v1018 = vadd.f32 %v997, %v1013
        %v1019 = vadd.f32 %v1000, %v1015
        %v1020 = vld [vmem:[%s11] sm:$0x1]
        %v1022 = vlaneseq
        %v1023 = vshrl.u32 %v1022, 7
        %v1024 = vsub.s32 0, %v1023
        %v1025 = vrot.slane %v1020, %v1024
        %1026 = vrot.lane.b32.xlu0 %v1025, 32
        %v1027 = vpop.permute.xlu0 %1026
        %v1029 = vadd.f32 %v1018, %v1027
        %v1030 = vadd.f32 %v1019, %v1027
        %v1031 = vmax.f32 %v1029, 0.0
        %v1032 = vmax.f32 %v1030, 0.0
        %v1033 = vld [vmem:[%s12] sm:$0xf]
        %v1034 = vld [vmem:[%s12 + $0x4] sm:$0xf]
        %v1035 = vld [vmem:[%s12 + $0x8] sm:$0xf]
        %v1036 = vld [vmem:[%s12 + $0xc] sm:$0xf]
        %v1037 = vpack.c.bf16 %v1032, %v1031
        %1039 = vrot.lane.b32.xlu0 %v1037, 96
        %v1040 = vpop.permute.xlu0 %1039
        %v1045 = vunpack.c.l.b16 %v1033
        %v1046 = vunpack.c.l.b16 %v1034
        %v1047 = vunpack.c.l.b16 %v1035
        %v1048 = vunpack.c.l.b16 %v1036
        %v1049 = vpack.c.b16 %v1046, %v1045
        %v1050 = vpack.c.b16 %v1048, %v1047
        %v1054 = vsel %vm662, %v1040, 0
        %1056 = vmatprep.subr.bf16.mxu0 0
        %1057 = vmatpush1.bf16.msra.mxu0 %v1049
        %1058 = vmatprep.subr.bf16.mxu0 0
        %1059 = vmatpush1.bf16.msra.mxu0 %v1050
        %1060 = vmatprep.subr.bf16.mxu0 0
        %1061 = vmatpush1.bf16.msra.mxu0 0
        %1062 = vmatprep.subr.bf16.mxu0 0
        %1063 = vmatpush1.bf16.msra.mxu0 0
        %1064 = vmatprep.subr.bf16.mxu0 0
        %1065 = vmatpush1.bf16.msra.mxu0 0
        %1066 = vmatprep.subr.bf16.mxu0 0
        %1067 = vmatpush1.bf16.msra.mxu0 0
        %1068 = vmatprep.subr.bf16.mxu0 0
        %1069 = vmatpush1.bf16.msra.mxu0 0
        %1070 = vmatprep.subr.bf16.mxu0 0
        %1071 = vmatpush1.bf16.msra.mxu0 0
        %1072 = vmatprep.subr.bf16.mxu0 0
        %1073 = vmatpush1.bf16.msra.mxu0 0
        %1074 = vmatprep.subr.bf16.mxu0 0
        %1075 = vmatpush1.bf16.msra.mxu0 0
        %1076 = vmatprep.subr.bf16.mxu0 0
        %1077 = vmatpush1.bf16.msra.mxu0 0
        %1078 = vmatprep.subr.bf16.mxu0 0
        %1079 = vmatpush1.bf16.msra.mxu0 0
        %1080 = vmatprep.subr.bf16.mxu0 0
        %1081 = vmatpush1.bf16.msra.mxu0 0
        %1082 = vmatprep.subr.bf16.mxu0 0
        %1083 = vmatpush1.bf16.msra.mxu0 0
        %1084 = vmatprep.subr.bf16.mxu0 0
        %1085 = vmatpush1.bf16.msra.mxu0 0
        %1086 = vmatprep.subr.bf16.mxu0 0
        %1087 = vmatpush1.bf16.msra.mxu0 0
        %1088 = vmatprep.mubr.bf16.mxu0 0
        %1089 = vmatmul.mubr.bf16.gmra.mrb[0].mxu0 %v1054
        %v1090 = vpop.f32.mrb[0].mxu0
        %v1091 = vadd.f32 0.0, %v1090
        %v1092 = vpop.f32.mrb[0].mxu0
        %v1093 = vpop.f32.mrb[0].mxu0
        %v1094 = vadd.f32 0.0, %v1093
        %v1095 = vpop.f32.mrb[0].mxu0
        %1096 = vdwg.mxu0
        %v1099 = vrot.slane %v1091, 4
        %v1100 = vrot.slane %v1094, 4
        %v1101 = vsel %vm1005, %v1099, %v1100
        %v1103 = vsel %vm1005, 0.0, %v1099
        %1105 = vrot.lane.b32.xlu0 %v1103, 32
        %v1106 = vpop.permute.xlu0 %1105
        %1107 = vrot.lane.b32.xlu0 %v1101, 32
        %v1108 = vpop.permute.xlu0 %1107
        %v1111 = vadd.f32 %v1091, %v1106
        %v1112 = vadd.f32 %v1094, %v1108
        %v1113 = vld [vmem:[%s13] sm:$0x1]
        %v1115 = vlaneseq
        %v1116 = vshrl.u32 %v1115, 7
        %v1117 = vsub.s32 0, %v1116
        %v1118 = vrot.slane %v1113, %v1117
        %1119 = vrot.lane.b32.xlu0 %v1118, 32
        %v1120 = vpop.permute.xlu0 %1119
        %v1122 = vadd.f32 %v1111, %v1120
        %v1123 = vadd.f32 %v1112, %v1120
        %v1124 = vmax.f32 %v1122, 0.0
        %v1125 = vmax.f32 %v1123, 0.0
        %v1126 = vadd.f32 %v1124, %v937
        %v1127 = vadd.f32 %v1125, %v938
        %v1128 = vmax.f32 %v1126, 0.0
        %v1129 = vmax.f32 %v1127, 0.0
        %v1130 = vpack.c.bf16 %v1129, %v1128
        %v1131 = vld [vmem:[%s14] sm:$0xf]
        %v1132 = vld [vmem:[%s14 + $0x4] sm:$0xf]
        %v1133 = vld [vmem:[%s14 + $0x8] sm:$0xf]
        %v1134 = vld [vmem:[%s14 + $0xc] sm:$0xf]
        %v1135 = vld [vmem:[%s15] sm:$0x1]
        %v1137 = vlaneseq
        %v1138 = vshrl.u32 %v1137, 7
        %v1139 = vsub.s32 0, %v1138
        %v1140 = vrot.slane %v1135, %v1139
        %1143 = vrot.lane.b32.xlu0 %v1130, 96
        %v1144 = vpop.permute.xlu0 %1143
        %v1149 = vunpack.c.l.b16 %v1131
        %v1150 = vunpack.c.l.b16 %v1132
        %v1151 = vunpack.c.l.b16 %v1133
        %v1152 = vunpack.c.l.b16 %v1134
        %v1153 = vpack.c.b16 %v1150, %v1149
        %v1154 = vpack.c.b16 %v1152, %v1151
        %v1158 = vsel %vm662, %v1144, 0
        %1160 = vmatprep.subr.bf16.mxu0 0
        %1161 = vmatpush1.bf16.msra.mxu0 %v1153
        %1162 = vmatprep.subr.bf16.mxu0 0
        %1163 = vmatpush1.bf16.msra.mxu0 %v1154
        %1164 = vmatprep.subr.bf16.mxu0 0
        %1165 = vmatpush1.bf16.msra.mxu0 0
        %1166 = vmatprep.subr.bf16.mxu0 0
        %1167 = vmatpush1.bf16.msra.mxu0 0
        %1168 = vmatprep.subr.bf16.mxu0 0
        %1169 = vmatpush1.bf16.msra.mxu0 0
        %1170 = vmatprep.subr.bf16.mxu0 0
        %1171 = vmatpush1.bf16.msra.mxu0 0
        %1172 = vmatprep.subr.bf16.mxu0 0
        %1173 = vmatpush1.bf16.msra.mxu0 0
        %1174 = vmatprep.subr.bf16.mxu0 0
        %1175 = vmatpush1.bf16.msra.mxu0 0
        %1176 = vmatprep.subr.bf16.mxu0 0
        %1177 = vmatpush1.bf16.msra.mxu0 0
        %1178 = vmatprep.subr.bf16.mxu0 0
        %1179 = vmatpush1.bf16.msra.mxu0 0
        %1180 = vmatprep.subr.bf16.mxu0 0
        %1181 = vmatpush1.bf16.msra.mxu0 0
        %1182 = vmatprep.subr.bf16.mxu0 0
        %1183 = vmatpush1.bf16.msra.mxu0 0
        %1184 = vmatprep.subr.bf16.mxu0 0
        %1185 = vmatpush1.bf16.msra.mxu0 0
        %1186 = vmatprep.subr.bf16.mxu0 0
        %1187 = vmatpush1.bf16.msra.mxu0 0
        %1188 = vmatprep.subr.bf16.mxu0 0
        %1189 = vmatpush1.bf16.msra.mxu0 0
        %1190 = vmatprep.subr.bf16.mxu0 0
        %1191 = vmatpush1.bf16.msra.mxu0 0
        %1192 = vmatprep.mubr.bf16.mxu0 0
        %1193 = vmatmul.mubr.bf16.gmra.mrb[0].mxu0 %v1158
        %v1194 = vpop.f32.mrb[0].mxu0
        %v1195 = vadd.f32 %v1140, %v1194
        %v1196 = vpop.f32.mrb[0].mxu0
        %v1197 = vpop.f32.mrb[0].mxu0
        %v1198 = vadd.f32 %v1140, %v1197
        %v1199 = vpop.f32.mrb[0].mxu0
        %1200 = vdwg.mxu0
        %vm1201 = vcmask 130048
        %1202 = vst.msk [vmem:[%s514] sm:$0xff] %vm1201, %v1195
        %1203 = vst.msk [vmem:[%s514 + $0x8] sm:$0xff] %vm1201, %v1198
        %s1204 = sand.u32 %s379, 1
        %s1205 = scalar_lea.sflag [#allocation3], %s1204
        %s1206 = sand.u32 %s379, 1
        %s1207 = smul.addr %s1206, 16
        %s1208 = scalar_lea.vmem [#allocation2], %s1207
        // Predicated region
        $region85: #{text_encoder_tcn_forward.1} parent=83 // pred_check
          %p1209 = pneg %p389
        $region86: #{text_encoder_tcn_forward.1} parent=83 // pred_check_branch
          %1211 = sbr.rel (%p1209) target = $region88
        $region87: #{text_encoder_tcn_forward.1} parent=83 // pred_region
          %s1213 = ssub.s32 256, 256
          %1214 = vsyncadd %s1205, %s1213
          %s1215 = smul.addr %s30, 2
          %s1216 = smul.addr %s1215, 128
          %s1217 = scalar_lea.hbm %s16, %s1216
          %s1218 = sshll.u32 %s1208, 4
          %s1219 = int_to_ptr.vmem [resolvable:$true] %s1218
          %1224 = dma.vmem_to_hbm [thread:$0]  %s1219, 256, %s1217, %s1205, 128, 128, 8
        $region88: #{text_encoder_tcn_forward.1} parent=83 // pred_fallthru
          _
      $region84: #{text_encoder_tcn_forward.1} parent=5 // pred_fallthru
        _
      %p1225 = scmp.le.s32.totalorder 2, %s25
      // Predicated region
      $region89: #{text_encoder_tcn_forward.1} parent=5 // pred_check
        %p1226 = pneg %p1225
      $region90: #{text_encoder_tcn_forward.1} parent=5 // pred_check_branch
        %1228 = sbr.rel (%p1226) target = $region92
      $region91: #{text_encoder_tcn_forward.1} parent=5 // pred_region
        %s1229 = ssub.s32 %s25, 2
        // Predicated region
        $region93: #{text_encoder_tcn_forward.1} parent=91 // pred_check
          %p1230 = pneg %p395
        $region94: #{text_encoder_tcn_forward.1} parent=91 // pred_check_branch
          %1232 = sbr.rel (%p1230) target = $region96
        $region95: #{text_encoder_tcn_forward.1} parent=91 // pred_region
          %s1233 = sand.u32 %s380, 1
          %s1234 = scalar_lea.sflag [#allocation3], %s1233
          %s1235 = sand.u32 %s380, 1
          %s1236 = smul.addr %s1235, 16
          %s1237 = scalar_lea.vmem [#allocation2], %s1236
          %1238 = dma.done %s1234, 256
        $region96: #{text_encoder_tcn_forward.1} parent=91 // pred_fallthru
          _
      $region92: #{text_encoder_tcn_forward.1} parent=5 // pred_fallthru
        _
    $region6: #{text_encoder_tcn_forward.1} parent=1 // loop_footer
      %s29 = sadd.s32 1, %s25
    $region7: #{text_encoder_tcn_forward.1} parent=1 // loop_footer_branch
      %24 = sbr.rel target = $region3
    $region8: #{text_encoder_tcn_forward.1} parent=1 // loop_exit
      _
    %1239 = vsyncpa [#allocation3], 1
    %s1240 = scalar_lea.sflag [#allocation3], 1
    %1241 = vsyncpa %s1240, 1

</llo_original>
